<compile_context>
chip_gen: v7x
topology: tpu7x:2x2x1
jax: 0.10.0
libtpu: 0.0.40
codegen_flags: <defaults>
</compile_context>

<pallas_src>
import math
from functools import partial

import jax
import jax.numpy as jnp
from jax.experimental import pallas as pl
from jax.experimental.pallas import tpu as pltpu

CDTYPE = jnp.bfloat16      # storage/compute dtype for activations & weights
TM = 512                   # max output-pixel row tile per grid step

_CPARAMS = pltpu.CompilerParams(
    dimension_semantics=("parallel",),
    vmem_limit_bytes=32 * 1024 * 1024,   # safe on v7x (64 MiB/TC) and v5e/v6e
)


def _round_up(x, m):
    return ((x + m - 1) // m) * m


def _cdiv(a, b):
    return -(-a // b)


def _choose_tiles(M, max_off):
    """Pick (row tile tm, halo rows, padded row count Mp).

    The KxK taps need `max_off` extra rows beyond the current block; they are
    fetched as a *small* halo block (not a duplicate full block), so
    activation HBM reads are ~(1 + halo/tm)x.  tm is capped so small levels
    still get several grid steps (v7x megacore), and halo always divides tm.
    """
    halo = 128
    while halo < max_off and halo < TM:
        halo *= 2
    tm = min(TM, max(halo, _round_up(_cdiv(M, 4), halo)))
    if max_off > tm:                      # very wide rows: full-block fallback
        tm = _round_up(max_off, 128)
        halo = tm
    return tm, halo, _round_up(M, tm)


# ----------------------------------------------------------------------------
# Pallas kernel 1: fused KxK conv tile (optional fused residual add).
# Activation arrives as [current tm rows | halo rows]; taps are static row
# offsets gathered in VMEM; contraction runs on the MXU with f32 accumulation.
# ----------------------------------------------------------------------------
def _tap_conv_kernel(xc_ref, xh_ref, *rest, offs, tm, cin_p, relu, fused,
                     res_off):
    if res_off is not None:
        rc_ref, rh_ref, w_ref, b_ref, o_ref = rest
    else:
        w_ref, b_ref, o_ref = rest

    x2 = jnp.concatenate([xc_ref[...], xh_ref[...]], axis=0)   # (tm+halo, Cin_p)
    if fused:
        # Wide channels: one big MXU matmul on the assembled patch matrix.
        patches = jnp.concatenate([x2[o:o + tm] for o in offs], axis=1)
        acc = jnp.dot(patches, w_ref[...], preferred_element_type=jnp.float32)
    else:
        # Narrow channels: accumulate per-tap matmuls (no lane-axis concat).
        w = w_ref[...]
        acc = jnp.dot(x2[offs[0]:offs[0] + tm], w[:cin_p],
                      preferred_element_type=jnp.float32)
        for t in range(1, len(offs)):
            o = offs[t]
            acc = acc + jnp.dot(x2[o:o + tm], w[t * cin_p:(t + 1) * cin_p],
                                preferred_element_type=jnp.float32)

    acc = acc + b_ref[...]
    if relu:
        acc = jnp.maximum(acc, 0.0)
    if res_off is not None:
        r2 = jnp.concatenate([rc_ref[...], rh_ref[...]], axis=0)
        acc = acc + r2[res_off:res_off + tm].astype(jnp.float32)
    o_ref[...] = acc.astype(o_ref.dtype)


def tap_conv(x, wt, b, taps, spad, relu, cout, stride=1, residual=None):
    """Stride-1 KxK conv (NHWC) with zero pad `spad`, optional fused residual.

    x        : (N, H, W, Cin)
    wt       : (T*Cin_p, Cout_p) packed tap weights (tap-major rows)
    b        : (1, Cout_p) float32
    taps     : static list of (dh, dw) offsets into the padded input
    residual : optional (N, H, W, Cout) tensor added (in f32) after activation
    stride   : output subsampling folded into the final crop
    """
    N, H, W, Cin = x.shape
    T = len(taps)
    TCp, Cout_w = wt.shape
    Cin_p = TCp // T
    cdtype = wt.dtype

    Hp, Wp = H + 2 * spad, W + 2 * spad
    M = N * Hp * Wp
    offs = tuple(dh * Wp + dw for dh, dw in taps)
    max_off = max(offs)
    tm, halo, Mp = _choose_tiles(M, max_off)
    hstep = tm // halo

    def flat_pad(t, c_to):
        tq = jnp.pad(t.astype(cdtype),
                     ((0, 0), (spad, spad), (spad, spad),
                      (0, c_to - t.shape[-1])))
        tf = tq.reshape(M, c_to)
        return jnp.pad(tf, ((0, Mp + halo - M), (0, 0)))

    xf = flat_pad(x, Cin_p)
    inputs = [xf, xf]
    in_specs = [pl.BlockSpec((tm, Cin_p), lambda i: (i, 0)),
                pl.BlockSpec((halo, Cin_p), lambda i: ((i + 1) * hstep, 0))]

    res_off = None
    if residual is not None:
        rf = flat_pad(residual, Cout_w)
        inputs += [rf, rf]
        in_specs += [pl.BlockSpec((tm, Cout_w), lambda i: (i, 0)),
                     pl.BlockSpec((halo, Cout_w), lambda i: ((i + 1) * hstep, 0))]
        res_off = spad * Wp + spad

    inputs += [wt, b]
    in_specs += [pl.BlockSpec((TCp, Cout_w), lambda i: (0, 0)),
                 pl.BlockSpec((1, Cout_w), lambda i: (0, 0))]

    fused = (Cin_p % 128 == 0)
    kernel = partial(_tap_conv_kernel, offs=offs, tm=tm, cin_p=Cin_p,
                     relu=relu, fused=fused, res_off=res_off)
    out = pl.pallas_call(
        kernel,
        out_shape=jax.ShapeDtypeStruct((Mp, Cout_w), cdtype),
        grid=(Mp // tm,),
        in_specs=in_specs,
        out_specs=pl.BlockSpec((tm, Cout_w), lambda i: (i, 0)),
        compiler_params=_CPARAMS,
    )(*inputs)

    y = out[:M].reshape(N, Hp, Wp, Cout_w)
    return y[:, :H:stride, :W:stride, :cout]


# ----------------------------------------------------------------------------
# Pallas kernel 2: fused (concat along channels) + 1x1 conv.
# Each source tensor contracts with its own weight slice; the concatenated
# tensor never touches HBM.
# ----------------------------------------------------------------------------
def _cat_matmul_kernel(*refs, n, relu):
    x_refs = refs[:n]
    w_refs = refs[n:2 * n]
    b_ref = refs[2 * n]
    o_ref = refs[2 * n + 1]
    acc = jnp.dot(x_refs[0][...], w_refs[0][...],
                  preferred_element_type=jnp.float32)
    for i in range(1, n):
        acc = acc + jnp.dot(x_refs[i][...], w_refs[i][...],
                            preferred_element_type=jnp.float32)
    acc = acc + b_ref[...]
    if relu:
        acc = jnp.maximum(acc, 0.0)
    o_ref[...] = acc.astype(o_ref.dtype)


def conv1x1_fused(xs, ws, b, relu, cout):
    N, H, W, _ = xs[0].shape
    M = N * H * W
    cdtype = ws[0].dtype
    Cout_p = ws[0].shape[1]
    tm = min(TM, max(128, _round_up(_cdiv(M, 4), 128)))
    Mp = _round_up(M, tm)

    xfs = []
    for xi, wi in zip(xs, ws):
        Ci = xi.shape[-1]
        Cip = wi.shape[0]
        xf = xi.astype(cdtype).reshape(M, Ci)
        xf = jnp.pad(xf, ((0, Mp - M), (0, Cip - Ci)))
        xfs.append(xf)

    n = len(xs)
    kernel = partial(_cat_matmul_kernel, n=n, relu=relu)
    in_specs = ([pl.BlockSpec((tm, wi.shape[0]), lambda i: (i, 0)) for wi in ws]
                + [pl.BlockSpec(wi.shape, lambda i: (0, 0)) for wi in ws]
                + [pl.BlockSpec((1, Cout_p), lambda i: (0, 0))])
    out = pl.pallas_call(
        kernel,
        out_shape=jax.ShapeDtypeStruct((Mp, Cout_p), cdtype),
        grid=(Mp // tm,),
        in_specs=in_specs,
        out_specs=pl.BlockSpec((tm, Cout_p), lambda i: (i, 0)),
        compiler_params=_CPARAMS,
    )(*xfs, *ws, b)
    return out[:M].reshape(N, H, W, Cout_p)[..., :cout]


# ----------------------------------------------------------------------------
# Weight packing (once at init; no per-forward transposes)
# ----------------------------------------------------------------------------
def _pack_conv(w_oihw, b, dtype):
    """(Cout, Cin, K, K) PyTorch conv weight -> (K*K*Cin_p, Cout_p)."""
    Cout, Cin, K, _ = w_oihw.shape
    Cin_p = _round_up(Cin, 8)
    Cout_p = _round_up(Cout, 8)
    wt = jnp.transpose(w_oihw, (2, 3, 1, 0))                        # (K,K,Cin,Cout)
    wt = jnp.pad(wt, ((0, 0), (0, 0), (0, Cin_p - Cin), (0, Cout_p - Cout)))
    wt = wt.reshape(K * K * Cin_p, Cout_p).astype(dtype)
    bp = jnp.pad(b, (0, Cout_p - Cout)).reshape(1, Cout_p).astype(jnp.float32)
    return wt, bp


def _pack_tconv(w_iohw, b, dtype):
    """(Cin, Cout, 4, 4) ConvTranspose2d(k=4,s=2,p=1) -> one (9*Cin_p, 4*Cout_p)
    matrix that maps the 3x3 tap gather to all 4 sub-pixel phases at once."""
    Cin, Cout, K, _ = w_iohw.shape
    assert K == 4
    Cin_p = _round_up(Cin, 8)
    Cout_p = _round_up(Cout, 8)
    Wfull = jnp.zeros((9, Cin_p, 4, Cout_p), jnp.float32)
    for a in (0, 1):
        for bb in (0, 1):
            p = 2 * a + bb
            for r_off in (a, a + 1):
                for c_off in (bb, bb + 1):
                    t = r_off * 3 + c_off
                    dh = 3 + a - 2 * r_off
                    dw = 3 + bb - 2 * c_off
                    m = w_iohw[:, :, dh, dw]                        # (Cin, Cout)
                    m = jnp.pad(m, ((0, Cin_p - Cin), (0, Cout_p - Cout)))
                    Wfull = Wfull.at[t, :, p, :].set(m)
    wt = Wfull.reshape(9 * Cin_p, 4 * Cout_p).astype(dtype)
    bp = jnp.tile(jnp.pad(b, (0, Cout_p - Cout)), 4)
    bp = bp.reshape(1, 4 * Cout_p).astype(jnp.float32)
    return wt, bp


def _pack_conv1x1_split(w_oi, b, cins, dtype):
    """(Cout, sum(cins), 1, 1) weight -> list of (Cin_i_p, Cout_p) blocks."""
    Cout = w_oi.shape[0]
    Cout_p = _round_up(Cout, 8)
    ws, off = [], 0
    for ci in cins:
        m = w_oi[:, off:off + ci, 0, 0].T                           # (ci, Cout)
        m = jnp.pad(m, ((0, _round_up(ci, 8) - ci), (0, Cout_p - Cout)))
        ws.append(m.astype(dtype))
        off += ci
    bp = jnp.pad(b, (0, Cout_p - Cout)).reshape(1, Cout_p).astype(jnp.float32)
    return ws, bp


# ----------------------------------------------------------------------------
# Layer appliers (static config at call sites; params hold arrays only)
# ----------------------------------------------------------------------------
def apply_conv(p, x, k, relu, cout, stride=1, residual=None):
    taps = [(kh, kw) for kh in range(k) for kw in range(k)]
    return tap_conv(x, p["wt"], p["b"], taps, k // 2, relu, cout,
                    stride=stride, residual=residual)


def apply_tconv(p, x, relu, cout):
    """ConvTranspose2d(k=4, s=2, p=1): one fused kernel + pixel shuffle."""
    N, H, W, _ = x.shape
    wt, b = p["wt"], p["b"]
    Cout_p = wt.shape[1] // 4
    taps = [(r, c) for r in range(3) for c in range(3)]
    y = tap_conv(x, wt, b, taps, 1, relu, wt.shape[1])     # (N,H,W,4*Cout_p)
    y = y.reshape(N, H, W, 2, 2, Cout_p)[..., :cout]
    y = jnp.transpose(y, (0, 1, 3, 2, 4, 5)).reshape(N, 2 * H, 2 * W, cout)
    return y


def apply_cat1x1(p, xs, relu, cout):
    return conv1x1_fused(xs, p["ws"], p["b"], relu, cout)


# ----------------------------------------------------------------------------
# Parameters (deterministic synthetic init)
# ----------------------------------------------------------------------------
class ParamGen:
    def __init__(self, seed=0):
        self._key = jax.random.PRNGKey(seed)

    def next_key(self):
        self._key, k = jax.random.split(self._key)
        return k


def init_conv(pg, cin, cout, k, dtype=CDTYPE):
    std = 0.5 / math.sqrt(cin * k * k)
    w = jax.random.normal(pg.next_key(), (cout, cin, k, k), jnp.float32) * std
    b = jnp.zeros((cout,), jnp.float32)
    wt, bp = _pack_conv(w, b, dtype)
    return {"wt": wt, "b": bp}


def init_tconv(pg, cin, cout, dtype=CDTYPE):
    std = 0.5 / math.sqrt(cin * 16)
    w = jax.random.normal(pg.next_key(), (cin, cout, 4, 4), jnp.float32) * std
    b = jnp.zeros((cout,), jnp.float32)
    wt, bp = _pack_tconv(w, b, dtype)
    return {"wt": wt, "b": bp}


def init_conv1x1(pg, cins, cout, dtype=CDTYPE):
    cin = sum(cins)
    std = 0.5 / math.sqrt(cin)
    w = jax.random.normal(pg.next_key(), (cout, cin, 1, 1), jnp.float32) * std
    b = jnp.zeros((cout,), jnp.float32)
    ws, bp = _pack_conv1x1_split(w, b, cins, dtype)
    return {"ws": ws, "b": bp}


def init_rbs(pg, nf):
    return [{"c1": init_conv(pg, nf, nf, 3), "c2": init_conv(pg, nf, nf, 3)}
            for _ in range(8)]


def apply_rbs(blocks, x):
    c = x.shape[-1]
    for blk in blocks:
        y = apply_conv(blk["c1"], x, 3, True, c)
        # residual add fused into the second conv's kernel (f32 accumulate)
        x = apply_conv(blk["c2"], y, 3, False, c, residual=x)
    return x


def init_scm(pg, out_ch):
    return {
        "b0": init_conv(pg, 3, out_ch // 4, 3),
        "b1": init_conv1x1(pg, [out_ch // 4], out_ch // 2),
        "b2": init_conv(pg, out_ch // 2, out_ch // 2, 3),
        "b3": init_conv1x1(pg, [out_ch // 2], out_ch - 3),
        "conv": init_conv1x1(pg, [3, out_ch - 3], out_ch),
    }


def apply_scm(p, x, out_ch):
    y = apply_conv(p["b0"], x, 3, True, out_ch // 4)
    y = apply_cat1x1(p["b1"], [y], True, out_ch // 2)
    y = apply_conv(p["b2"], y, 3, True, out_ch // 2)
    y = apply_cat1x1(p["b3"], [y], True, out_ch - 3)
    # torch.cat([x, body(x)], dim=C) + 1x1 conv, concat fused away.
    return apply_cat1x1(p["conv"], [x, y], False, out_ch)


def init_fam(pg, nf):
    return {"conv": init_conv(pg, nf, nf, 3)}


def apply_fam(p, eb, scm):
    # EB + conv(EB * SCM): the outer residual is fused into the conv kernel.
    return apply_conv(p["conv"], eb * scm, 3, False, eb.shape[-1], residual=eb)


def init_aff(pg, cins, cout):
    return {"l1": init_conv1x1(pg, cins, cout),
            "l2": init_conv(pg, cout, cout, 3)}


def apply_aff(p, xs, cout):
    y = apply_cat1x1(p["l1"], xs, True, cout)
    return apply_conv(p["l2"], y, 3, False, cout)


def init_mimounet(seed=0):
    pg = ParamGen(seed)
    nf = 32
    return {
        "Encoder": [init_rbs(pg, nf), init_rbs(pg, nf * 2), init_rbs(pg, nf * 4)],
        "feat_extract": [
            init_conv(pg, 3, nf, 3),
            init_conv(pg, nf, nf * 2, 3),
            init_conv(pg, nf * 2, nf * 4, 3),
            init_tconv(pg, nf * 4, nf * 2),
            init_tconv(pg, nf * 2, nf),
            init_conv(pg, nf, 3, 3),
        ],
        "Decoder": [init_rbs(pg, nf * 4), init_rbs(pg, nf * 2), init_rbs(pg, nf)],
        "Convs": [init_conv1x1(pg, [nf * 2, nf * 2], nf * 2),
                  init_conv1x1(pg, [nf, nf], nf)],
        "ConvsOut": [init_conv(pg, nf * 4, 3, 3), init_conv(pg, nf * 2, 3, 3)],
        "AFFs": [init_aff(pg, [nf, nf * 2, nf * 4], nf),
                 init_aff(pg, [nf, nf * 2, nf * 4], nf * 2)],
        "FAM2": init_fam(pg, nf * 2),
        "SCM2": init_scm(pg, nf * 2),
        "FAM3": init_fam(pg, nf * 4),
        "SCM3": init_scm(pg, nf * 4),
    }


# ----------------------------------------------------------------------------
# Resampling glue (exact PyTorch F.interpolate semantics)
# ----------------------------------------------------------------------------
def bilinear_down2(x):
    # scale_factor=0.5, mode='bilinear', align_corners=False == 2x2 avg pool.
    N, H, W, C = x.shape
    return x.reshape(N, H // 2, 2, W // 2, 2, C).mean(axis=(2, 4))


def nearest_down2(x):
    return x[:, ::2, ::2, :]


def nearest_up2(x):
    return jnp.repeat(jnp.repeat(x, 2, axis=1), 2, axis=2)


# ----------------------------------------------------------------------------
# MIMOUNet forward (NHWC)
# ----------------------------------------------------------------------------
def mimounet_forward(params, x):
    nf = 32
    x = x.astype(CDTYPE)
    x2 = bilinear_down2(x)
    x3 = bilinear_down2(x2)
    z2 = apply_scm(params["SCM2"], x2, nf * 2)
    z3 = apply_scm(params["SCM3"], x3, nf * 4)

    x1 = apply_conv(params["feat_extract"][0], x, 3, True, nf)
    res1 = apply_rbs(params["Encoder"][0], x1)
    z = apply_conv(params["feat_extract"][1], res1, 3, True, nf * 2, stride=2)
    z = apply_fam(params["FAM2"], z, z2)
    res2 = apply_rbs(params["Encoder"][1], z)
    z = apply_conv(params["feat_extract"][2], res2, 3, True, nf * 4, stride=2)
    z = apply_fam(params["FAM3"], z, z3)
    z = apply_rbs(params["Encoder"][2], z)

    z12 = nearest_down2(res1)
    z21 = nearest_up2(res2)
    z32 = nearest_up2(z)
    z31 = nearest_up2(z32)
    res1 = apply_aff(params["AFFs"][0], [res1, z21, z31], nf)
    res2 = apply_aff(params["AFFs"][1], [z12, res2, z32], nf * 2)

    z = apply_rbs(params["Decoder"][0], z)
    s3 = apply_conv(params["ConvsOut"][0], z, 3, True, 3)
    out3 = (s3 + x3).astype(jnp.float32)

    z = apply_tconv(params["feat_extract"][3], z, True, nf * 2)
    z = apply_cat1x1(params["Convs"][0], [z, res2], True, nf * 2)
    z = apply_rbs(params["Decoder"][1], z)
    s2 = apply_conv(params["ConvsOut"][1], z, 3, True, 3)
    out2 = (s2 + x2).astype(jnp.float32)

    z = apply_tconv(params["feat_extract"][4], z, True, nf)
    z = apply_cat1x1(params["Convs"][1], [z, res1], True, nf)
    z = apply_rbs(params["Decoder"][2], z)
    s1 = apply_conv(params["feat_extract"][5], z, 3, False, 3)
    out1 = (s1 + x).astype(jnp.float32)
    return [out3, out2, out1]


# ----------------------------------------------------------------------------
# Self-check of the Pallas conv lowerings against XLA reference convs (f32)
# ----------------------------------------------------------------------------
def _assert_close(got, want, name):
    got = jnp.asarray(got, jnp.float32)
    want = jnp.asarray(want, jnp.float32)
    assert got.shape == want.shape, (name, got.shape, want.shape)
    err = float(jnp.max(jnp.abs(got - want)))
    scale = float(jnp.max(jnp.abs(want))) + 1e-6
    assert err <= 2e-2 * scale + 1e-3, f"{name}: max abs err {err} vs scale {scale}"


def _self_check():
    key = jax.random.PRNGKey(7)
    ks = jax.random.split(key, 8)
    f32 = jnp.float32

    def ref_conv(x, w_oihw, b, stride, pad):
        y = jax.lax.conv_general_dilated(
            x, jnp.transpose(w_oihw, (2, 3, 1, 0)), (stride, stride),
            [(pad, pad), (pad, pad)],
            dimension_numbers=("NHWC", "HWIO", "NHWC"))
        return y + b.reshape(1, 1, 1, -1)

    # 3x3 conv, stride 1 and 2, narrow channels (per-tap MXU path).
    N, H, W, cin, cout = 2, 10, 14, 5, 7
    x = jax.random.normal(ks[0], (N, H, W, cin), f32)
    w = jax.random.normal(ks[1], (cout, cin, 3, 3), f32) * 0.2
    b = jax.random.normal(ks[2], (cout,), f32) * 0.1
    wt, bp = _pack_conv(w, b, f32)
    for s in (1, 2):
        got = apply_conv({"wt": wt, "b": bp}, x, 3, False, cout, stride=s)
        _assert_close(got, ref_conv(x, w, b, s, 1), f"conv3x3_s{s}")

    # fused residual add (ResBlock second-conv / FAM path).
    r = jax.random.normal(ks[3], (N, H, W, cout), f32)
    got = apply_conv({"wt": wt, "b": bp}, x, 3, False, cout, residual=r)
    _assert_close(got, ref_conv(x, w, b, 1, 1) + r, "conv3x3_residual")

    # wide channels (single fused-patch MXU matmul path).
    cin_w, cout_w = 128, 16
    xw = jax.random.normal(ks[4], (1, 6, 6, cin_w), f32) * 0.1
    ww = jax.random.normal(ks[5], (cout_w, cin_w, 3, 3), f32) * 0.05
    bw = jax.random.normal(ks[6], (cout_w,), f32) * 0.1
    wtw, bpw = _pack_conv(ww, bw, f32)
    got = apply_conv({"wt": wtw, "b": bpw}, xw, 3, True, cout_w)
    _assert_close(got, jnp.maximum(ref_conv(xw, ww, bw, 1, 1), 0.0),
                  "conv3x3_wide")

    # fused concat + 1x1 conv.
    c0, c1 = 5, 9
    xa = jax.random.normal(ks[0], (N, H, W, c0), f32)
    xb = jax.random.normal(ks[6], (N, H, W, c1), f32)
    w1 = jax.random.normal(ks[7], (cout, c0 + c1, 1, 1), f32) * 0.2
    ws, bp1 = _pack_conv1x1_split(w1, b, [c0, c1], f32)
    got = apply_cat1x1({"ws": ws, "b": bp1}, [xa, xb], True, cout)
    want = jnp.maximum(ref_conv(jnp.concatenate([xa, xb], -1), w1, b, 1, 0), 0.0)
    _assert_close(got, want, "cat_1x1_relu")

    # transposed conv (k=4, s=2, p=1), all 4 sub-pixel phases in one kernel.
    wt4 = jax.random.normal(ks[5], (cin, cout, 4, 4), f32) * 0.2
    wtp, bpt = _pack_tconv(wt4, b, f32)
    got = apply_tconv({"wt": wtp, "b": bpt}, x, False, cout)
    wr = jnp.transpose(jnp.flip(wt4, axis=(2, 3)), (2, 3, 0, 1))    # HWIO
    want = jax.lax.conv_general_dilated(
        x, wr, (1, 1), [(2, 2), (2, 2)], lhs_dilation=(2, 2),
        dimension_numbers=("NHWC", "HWIO", "NHWC")) + b.reshape(1, 1, 1, -1)
    _assert_close(got, want, "tconv4x4_s2")


if __name__ == "__main__":
    _self_check()

    key = jax.random.PRNGKey(0)
    # PyTorch-style NCHW input, transposed to the NHWC kernel layout.
    x_nchw = jax.random.normal(key, (2, 3, 16, 16), jnp.float32)
    x = jnp.transpose(x_nchw, (0, 2, 3, 1))

    params = init_mimounet(seed=0)
    fwd = jax.jit(mimounet_forward)
    outs = fwd(params, x)
    outs = [jax.block_until_ready(o) for o in outs]

    assert outs[0].shape == (2, 4, 4, 3)
    assert outs[1].shape == (2, 8, 8, 3)
    assert outs[2].shape == (2, 16, 16, 3)
    assert all(bool(jnp.all(jnp.isfinite(o))) for o in outs)
    print("KERNEL_OK")
</pallas_src>

<mosaic_0001>
module attributes {stable_mosaic.version = 11 : i64} {
  func.func @_tap_conv_kernel(%arg0: i32, %arg1: memref<128x8xf32, #tpu.memory_space<vmem>>, %arg2: memref<128x8xf32, #tpu.memory_space<vmem>>, %arg3: memref<72x8xf32, #tpu.memory_space<vmem>>, %arg4: memref<1x8xf32, #tpu.memory_space<vmem>>, %arg5: memref<128x8xf32, #tpu.memory_space<vmem>>) attributes {dimension_semantics = [#tpu.dimension_semantics<parallel>], iteration_bounds = array<i64: 3>, scalar_prefetch = 0 : i64, scratch_operands = 0 : i64, tpu.core_type = #tpu.core_type<tc>, window_params = [{transform_indices = @transform_0, window_bounds = array<i64: 128, 8>}, {transform_indices = @transform_1, window_bounds = array<i64: 128, 8>}, {pipeline_mode = #tpu.pipeline_mode<synchronous>, transform_indices = @transform_2, window_bounds = array<i64: 72, 8>}, {pipeline_mode = #tpu.pipeline_mode<synchronous>, transform_indices = @transform_3, window_bounds = array<i64: 1, 8>}, {transform_indices = @transform_4, window_bounds = array<i64: 128, 8>}]} {
    %c0 = arith.constant 0 : index
    %c0_0 = arith.constant 0 : index
    %0 = vector.load %arg1[%c0, %c0_0] : memref<128x8xf32, #tpu.memory_space<vmem>>, vector<128x8xf32>
    %c0_1 = arith.constant 0 : index
    %c0_2 = arith.constant 0 : index
    %1 = vector.load %arg2[%c0_1, %c0_2] : memref<128x8xf32, #tpu.memory_space<vmem>>, vector<128x8xf32>
    %2 = tpu.concatenate %0, %1 in 0 : vector<128x8xf32>, vector<128x8xf32> -> vector<256x8xf32>
    %c0_3 = arith.constant 0 : index
    %c0_4 = arith.constant 0 : index
    %3 = vector.load %arg3[%c0_3, %c0_4] : memref<72x8xf32, #tpu.memory_space<vmem>>, vector<72x8xf32>
    %4 = vector.extract_strided_slice %2 {offsets = [0, 0], sizes = [128, 8], strides = [1, 1]} : vector<256x8xf32> to vector<128x8xf32>
    %5 = vector.extract_strided_slice %3 {offsets = [0, 0], sizes = [8, 8], strides = [1, 1]} : vector<72x8xf32> to vector<8x8xf32>
    %cst = arith.constant dense<0.000000e+00> : vector<128x8xf32>
    %6 = tpu.matmul %4, %5, %cst {dimension_numbers = #tpu.dot_dimension_numbers<[1], [0], [0], [1], [0, 0, 1, 1], [], []>} : vector<128x8xf32>, vector<8x8xf32>, vector<128x8xf32> -> vector<128x8xf32>
    %7 = vector.extract_strided_slice %2 {offsets = [1, 0], sizes = [128, 8], strides = [1, 1]} : vector<256x8xf32> to vector<128x8xf32>
    %8 = vector.extract_strided_slice %3 {offsets = [8, 0], sizes = [8, 8], strides = [1, 1]} : vector<72x8xf32> to vector<8x8xf32>
    %cst_5 = arith.constant dense<0.000000e+00> : vector<128x8xf32>
    %9 = tpu.matmul %7, %8, %cst_5 {dimension_numbers = #tpu.dot_dimension_numbers<[1], [0], [0], [1], [0, 0, 1, 1], [], []>} : vector<128x8xf32>, vector<8x8xf32>, vector<128x8xf32> -> vector<128x8xf32>
    %10 = arith.addf %6, %9 : vector<128x8xf32>
    %11 = vector.extract_strided_slice %2 {offsets = [2, 0], sizes = [128, 8], strides = [1, 1]} : vector<256x8xf32> to vector<128x8xf32>
    %12 = vector.extract_strided_slice %3 {offsets = [16, 0], sizes = [8, 8], strides = [1, 1]} : vector<72x8xf32> to vector<8x8xf32>
    %cst_6 = arith.constant dense<0.000000e+00> : vector<128x8xf32>
    %13 = tpu.matmul %11, %12, %cst_6 {dimension_numbers = #tpu.dot_dimension_numbers<[1], [0], [0], [1], [0, 0, 1, 1], [], []>} : vector<128x8xf32>, vector<8x8xf32>, vector<128x8xf32> -> vector<128x8xf32>
    %14 = arith.addf %10, %13 : vector<128x8xf32>
    %15 = vector.extract_strided_slice %2 {offsets = [16, 0], sizes = [128, 8], strides = [1, 1]} : vector<256x8xf32> to vector<128x8xf32>
    %16 = vector.extract_strided_slice %3 {offsets = [24, 0], sizes = [8, 8], strides = [1, 1]} : vector<72x8xf32> to vector<8x8xf32>
    %cst_7 = arith.constant dense<0.000000e+00> : vector<128x8xf32>
    %17 = tpu.matmul %15, %16, %cst_7 {dimension_numbers = #tpu.dot_dimension_numbers<[1], [0], [0], [1], [0, 0, 1, 1], [], []>} : vector<128x8xf32>, vector<8x8xf32>, vector<128x8xf32> -> vector<128x8xf32>
    %18 = arith.addf %14, %17 : vector<128x8xf32>
    %19 = vector.extract_strided_slice %2 {offsets = [17, 0], sizes = [128, 8], strides = [1, 1]} : vector<256x8xf32> to vector<128x8xf32>
    %20 = vector.extract_strided_slice %3 {offsets = [32, 0], sizes = [8, 8], strides = [1, 1]} : vector<72x8xf32> to vector<8x8xf32>
    %cst_8 = arith.constant dense<0.000000e+00> : vector<128x8xf32>
    %21 = tpu.matmul %19, %20, %cst_8 {dimension_numbers = #tpu.dot_dimension_numbers<[1], [0], [0], [1], [0, 0, 1, 1], [], []>} : vector<128x8xf32>, vector<8x8xf32>, vector<128x8xf32> -> vector<128x8xf32>
    %22 = arith.addf %18, %21 : vector<128x8xf32>
    %23 = vector.extract_strided_slice %2 {offsets = [18, 0], sizes = [128, 8], strides = [1, 1]} : vector<256x8xf32> to vector<128x8xf32>
    %24 = vector.extract_strided_slice %3 {offsets = [40, 0], sizes = [8, 8], strides = [1, 1]} : vector<72x8xf32> to vector<8x8xf32>
    %cst_9 = arith.constant dense<0.000000e+00> : vector<128x8xf32>
    %25 = tpu.matmul %23, %24, %cst_9 {dimension_numbers = #tpu.dot_dimension_numbers<[1], [0], [0], [1], [0, 0, 1, 1], [], []>} : vector<128x8xf32>, vector<8x8xf32>, vector<128x8xf32> -> vector<128x8xf32>
    %26 = arith.addf %22, %25 : vector<128x8xf32>
    %27 = vector.extract_strided_slice %2 {offsets = [32, 0], sizes = [128, 8], strides = [1, 1]} : vector<256x8xf32> to vector<128x8xf32>
    %28 = vector.extract_strided_slice %3 {offsets = [48, 0], sizes = [8, 8], strides = [1, 1]} : vector<72x8xf32> to vector<8x8xf32>
    %cst_10 = arith.constant dense<0.000000e+00> : vector<128x8xf32>
    %29 = tpu.matmul %27, %28, %cst_10 {dimension_numbers = #tpu.dot_dimension_numbers<[1], [0], [0], [1], [0, 0, 1, 1], [], []>} : vector<128x8xf32>, vector<8x8xf32>, vector<128x8xf32> -> vector<128x8xf32>
    %30 = arith.addf %26, %29 : vector<128x8xf32>
    %31 = vector.extract_strided_slice %2 {offsets = [33, 0], sizes = [128, 8], strides = [1, 1]} : vector<256x8xf32> to vector<128x8xf32>
    %32 = vector.extract_strided_slice %3 {offsets = [56, 0], sizes = [8, 8], strides = [1, 1]} : vector<72x8xf32> to vector<8x8xf32>
    %cst_11 = arith.constant dense<0.000000e+00> : vector<128x8xf32>
    %33 = tpu.matmul %31, %32, %cst_11 {dimension_numbers = #tpu.dot_dimension_numbers<[1], [0], [0], [1], [0, 0, 1, 1], [], []>} : vector<128x8xf32>, vector<8x8xf32>, vector<128x8xf32> -> vector<128x8xf32>
    %34 = arith.addf %30, %33 : vector<128x8xf32>
    %35 = vector.extract_strided_slice %2 {offsets = [34, 0], sizes = [128, 8], strides = [1, 1]} : vector<256x8xf32> to vector<128x8xf32>
    %36 = vector.extract_strided_slice %3 {offsets = [64, 0], sizes = [8, 8], strides = [1, 1]} : vector<72x8xf32> to vector<8x8xf32>
    %cst_12 = arith.constant dense<0.000000e+00> : vector<128x8xf32>
    %37 = tpu.matmul %35, %36, %cst_12 {dimension_numbers = #tpu.dot_dimension_numbers<[1], [0], [0], [1], [0, 0, 1, 1], [], []>} : vector<128x8xf32>, vector<8x8xf32>, vector<128x8xf32> -> vector<128x8xf32>
    %38 = arith.addf %34, %37 : vector<128x8xf32>
    %c0_13 = arith.constant 0 : index
    %c0_14 = arith.constant 0 : index
    %39 = vector.load %arg4[%c0_13, %c0_14] : memref<1x8xf32, #tpu.memory_space<vmem>>, vector<1x8xf32>
    %40 = vector.broadcast %39 : vector<1x8xf32> to vector<128x8xf32>
    %41 = arith.addf %38, %40 : vector<128x8xf32>
    %c0_15 = arith.constant 0 : index
    %c0_16 = arith.constant 0 : index
    %42 = vector.load %arg5[%c0_15, %c0_16] : memref<128x8xf32, #tpu.memory_space<vmem>>, vector<128x8xf32>
    tpu.vector_store %arg5[%c0_15, %c0_16], %41 {strides = array<i32>} : memref<128x8xf32, #tpu.memory_space<vmem>>, vector<128x8xf32>,
    return
  }
  func.func @transform_0(%arg0: i32) -> (i32, i32) {
    %c0_i32 = arith.constant 0 : i32
    %c0_i32_0 = arith.constant 0 : i32
    return %arg0, %c0_i32 : i32, i32
  }
  func.func @transform_1(%arg0: i32) -> (i32, i32) {
    %c1_i32 = arith.constant 1 : i32
    %0 = arith.addi %arg0, %c1_i32 : i32
    %c1_i32_0 = arith.constant 1 : i32
    %1 = arith.muli %0, %c1_i32_0 : i32
    %c0_i32 = arith.constant 0 : i32
    %c0_i32_1 = arith.constant 0 : i32
    return %1, %c0_i32 : i32, i32
  }
  func.func @transform_2(%arg0: i32) -> (i32, i32) {
    %c0_i32 = arith.constant 0 : i32
    %c0_i32_0 = arith.constant 0 : i32
    %c0_i32_1 = arith.constant 0 : i32
    return %c0_i32, %c0_i32_0 : i32, i32
  }
  func.func @transform_3(%arg0: i32) -> (i32, i32) {
    %c0_i32 = arith.constant 0 : i32
    %c0_i32_0 = arith.constant 0 : i32
    %c0_i32_1 = arith.constant 0 : i32
    return %c0_i32, %c0_i32_0 : i32, i32
  }
  func.func @transform_4(%arg0: i32) -> (i32, i32) {
    %c0_i32 = arith.constant 0 : i32
    %c0_i32_0 = arith.constant 0 : i32
    return %arg0, %c0_i32 : i32, i32
  }
}

</mosaic_0001>

<llo_original>
// kernel: tpu_custom_call.1
$region0: #{tpu_custom_call.1}
  #allocation0 [shape = 'u32[]', space=smem, size = 0x4, offset = 0x4, fixed_abs, tag = 'smem constant byte address 0x4 - core index']
  #allocation1 [shape = 'u32[144,128]{1,0:T(1,128)}', space=vmem, size = 0x12000, scoped, tag = 'internal scratch']
  %s0 = inlined_call_operand.vmem [shape: f32[512,8], index: 0, kind: input, shape index: {}]
  %s1 = inlined_call_operand.vmem [shape: f32[512,8], index: 1, kind: input, shape index: {}]
  %s2 = inlined_call_operand.vmem [shape: f32[72,8], index: 2, kind: input, shape index: {}]
  %s3 = inlined_call_operand.vmem [shape: f32[1,8], index: 3, kind: input, shape index: {}]
  %s4 = inlined_call_operand.vmem [shape: f32[384,8], index: 4, kind: output, shape index: {}]
  %s5 = sld [smem:[#allocation0]]
  $region49: #{tpu_custom_call.1} parent=0
    _
  %s7 = ssub.s32 1, %s5
  %s8 = scalar_select 0, %s7, %s5
  loop: start=0, step=1, limit=5
  $region2: #{tpu_custom_call.1} parent=0 // loop_pre_header
    _
  $region3: #{tpu_custom_call.1} parent=0 // loop_header
    %s10 = sphi 0, %s14
    %p11 = scmp.ge.s32.totalorder %s10, 5
    %s20 = sphi 0, %s22
    %s23 = sphi 0, %s20
    %s24 = sphi 0, %s23
    %s40 = sphi 0, %s24
    %s48 = sphi 0, %s50
    %s51 = sphi 0, %s48
    %s52 = sphi 0, %s51
    %s68 = sphi 0, %s52
    %s72 = sphi 0, %s72
    %s74 = sphi 0, %s72
    %s75 = sphi 0, %s74
    %s89 = sphi 0, %s75
    %s93 = sphi 0, %s93
    %s95 = sphi 0, %s93
    %s96 = sphi 0, %s95
    %s110 = sphi 0, %s96
    %s116 = sphi 0, %s118
    %s119 = sphi 0, %s116
    %s120 = sphi 0, %s119
    %s136 = sphi 0, %s120
  $region4: #{tpu_custom_call.1} parent=0 // loop_header_branch
    %13 = sbr.rel (%p11) target = $region8
  $region5: #{tpu_custom_call.1} parent=0 // loop_body
    %s15 = ssub.s32 %s10, 1
    %s16 = ssub.s32 %s10, 2
    %s17 = sadd.s32 %s10, 1
    %s18 = ssub.s32 %s10, %s17
    %p19 = scmp.eq.s32.totalorder %s18, 0
    %s21 = sadd.s32 %s20, 1
    %s22 = scalar_select %p19, %s20, %s21
    %p25 = pneg %p19
    %p26 = scmp.eq.s32.totalorder %s10, 2
    %p27 = por %p25, %p26
    %p28 = scmp.ne.s32.totalorder %s20, %s23
    %p29 = scmp.eq.s32.totalorder %s10, 0
    %p30 = por %p28, %p29
    %p31 = scmp.ne.s32.totalorder %s20, %s23
    %p32 = scmp.eq.s32.totalorder %s15, 2
    %p33 = por %p31, %p32
    %p34 = scmp.ne.s32.totalorder %s23, %s24
    %p35 = scmp.eq.s32.totalorder %s15, 0
    %p36 = por %p34, %p35
    %p37 = scmp.ne.s32.totalorder %s23, %s24
    %p38 = scmp.eq.s32.totalorder %s16, 2
    %p39 = por %p37, %p38
    %p41 = scmp.ne.s32.totalorder %s24, %s40
    %p42 = scmp.eq.s32.totalorder %s16, 0
    %p43 = por %p41, %p42
    %s44 = sadd.s32 %s10, 1
    %s45 = sadd.s32 %s17, 1
    %s46 = ssub.s32 %s44, %s45
    %p47 = scmp.eq.s32.totalorder %s46, 0
    %s49 = sadd.s32 %s48, 1
    %s50 = scalar_select %p47, %s48, %s49
    %p53 = pneg %p47
    %p54 = scmp.eq.s32.totalorder %s10, 2
    %p55 = por %p53, %p54
    %p56 = scmp.ne.s32.totalorder %s48, %s51
    %p57 = scmp.eq.s32.totalorder %s10, 0
    %p58 = por %p56, %p57
    %p59 = scmp.ne.s32.totalorder %s48, %s51
    %p60 = scmp.eq.s32.totalorder %s15, 2
    %p61 = por %p59, %p60
    %p62 = scmp.ne.s32.totalorder %s51, %s52
    %p63 = scmp.eq.s32.totalorder %s15, 0
    %p64 = por %p62, %p63
    %p65 = scmp.ne.s32.totalorder %s51, %s52
    %p66 = scmp.eq.s32.totalorder %s16, 2
    %p67 = por %p65, %p66
    %p69 = scmp.ne.s32.totalorder %s52, %s68
    %p70 = scmp.eq.s32.totalorder %s16, 0
    %p71 = por %p69, %p70
    %s73 = sadd.s32 %s72, 1
    %p76 = scmp.eq.s32.totalorder %s10, 2
    %p77 = scmp.ne.s32.totalorder %s72, %s74
    %p78 = scmp.eq.s32.totalorder %s10, 0
    %p79 = por %p77, %p78
    %p80 = scmp.ne.s32.totalorder %s72, %s74
    %p81 = scmp.eq.s32.totalorder %s15, 2
    %p82 = por %p80, %p81
    %p83 = scmp.ne.s32.totalorder %s74, %s75
    %p84 = scmp.eq.s32.totalorder %s15, 0
    %p85 = por %p83, %p84
    %p86 = scmp.ne.s32.totalorder %s74, %s75
    %p87 = scmp.eq.s32.totalorder %s16, 2
    %p88 = por %p86, %p87
    %p90 = scmp.ne.s32.totalorder %s75, %s89
    %p91 = scmp.eq.s32.totalorder %s16, 0
    %p92 = por %p90, %p91
    %s94 = sadd.s32 %s93, 1
    %p97 = scmp.eq.s32.totalorder %s10, 2
    %p98 = scmp.ne.s32.totalorder %s93, %s95
    %p99 = scmp.eq.s32.totalorder %s10, 0
    %p100 = por %p98, %p99
    %p101 = scmp.ne.s32.totalorder %s93, %s95
    %p102 = scmp.eq.s32.totalorder %s15, 2
    %p103 = por %p101, %p102
    %p104 = scmp.ne.s32.totalorder %s95, %s96
    %p105 = scmp.eq.s32.totalorder %s15, 0
    %p106 = por %p104, %p105
    %p107 = scmp.ne.s32.totalorder %s95, %s96
    %p108 = scmp.eq.s32.totalorder %s16, 2
    %p109 = por %p107, %p108
    %p111 = scmp.ne.s32.totalorder %s96, %s110
    %p112 = scmp.eq.s32.totalorder %s16, 0
    %p113 = por %p111, %p112
    %s114 = ssub.s32 %s10, %s17
    %p115 = scmp.eq.s32.totalorder %s114, 0
    %s117 = sadd.s32 %s116, 1
    %s118 = scalar_select %p115, %s116, %s117
    %p121 = pneg %p115
    %p122 = scmp.eq.s32.totalorder %s10, 2
    %p123 = por %p121, %p122
    %p124 = scmp.ne.s32.totalorder %s116, %s119
    %p125 = scmp.eq.s32.totalorder %s10, 0
    %p126 = por %p124, %p125
    %p127 = scmp.ne.s32.totalorder %s116, %s119
    %p128 = scmp.eq.s32.totalorder %s15, 2
    %p129 = por %p127, %p128
    %p130 = scmp.ne.s32.totalorder %s119, %s120
    %p131 = scmp.eq.s32.totalorder %s15, 0
    %p132 = por %p130, %p131
    %p133 = scmp.ne.s32.totalorder %s119, %s120
    %p134 = scmp.eq.s32.totalorder %s16, 2
    %p135 = por %p133, %p134
    %p137 = scmp.ne.s32.totalorder %s120, %s136
    %p138 = scmp.eq.s32.totalorder %s16, 0
    %p139 = por %p137, %p138
    %p140 = scmp.le.s32.totalorder 1, %s10
    %p141 = scmp.lt.s32.totalorder %s10, 4
    %p142 = pnand %p140, %p141
    %p143 = pneg %p142
    // Predicated region
    $region9: #{tpu_custom_call.1} parent=5 // pred_check
      _
    $region10: #{tpu_custom_call.1} parent=5 // pred_check_branch
      %145 = sbr.rel (%p142) target = $region12
    $region11: #{tpu_custom_call.1} parent=5 // pred_region
      %s146 = ssub.s32 %s10, 1
      // Predicated region
      $region13: #{tpu_custom_call.1} parent=11 // pred_check
        %p147 = pneg %p85
      $region14: #{tpu_custom_call.1} parent=11 // pred_check_branch
        %149 = sbr.rel (%p147) target = $region16
      $region15: #{tpu_custom_call.1} parent=11 // pred_region
        _
      $region16: #{tpu_custom_call.1} parent=11 // pred_fallthru
        _
      // Predicated region
      $region17: #{tpu_custom_call.1} parent=11 // pred_check
        %p150 = pneg %p106
      $region18: #{tpu_custom_call.1} parent=11 // pred_check_branch
        %152 = sbr.rel (%p150) target = $region20
      $region19: #{tpu_custom_call.1} parent=11 // pred_region
        _
      $region20: #{tpu_custom_call.1} parent=11 // pred_fallthru
        _
    $region12: #{tpu_custom_call.1} parent=5 // pred_fallthru
      _
    %p153 = scmp.lt.s32.totalorder %s10, 3
    // Predicated region
    $region21: #{tpu_custom_call.1} parent=5 // pred_check
      %p154 = pneg %p153
    $region22: #{tpu_custom_call.1} parent=5 // pred_check_branch
      %156 = sbr.rel (%p154) target = $region24
    $region23: #{tpu_custom_call.1} parent=5 // pred_region
      // Predicated region
      $region25: #{tpu_custom_call.1} parent=23 // pred_check
        %p157 = pneg %p30
      $region26: #{tpu_custom_call.1} parent=23 // pred_check_branch
        %159 = sbr.rel (%p157) target = $region28
      $region27: #{tpu_custom_call.1} parent=23 // pred_region
        %s160 = smul.u32 16, %s10
        %p161 = scmp.lt.s32.totalorder %s160, 63
        %s162 = scalar_select %p161, %s160, 63
        %s163 = smul.addr %s162, 8
        %s164 = scalar_lea.vmem %s0, %s163
        %s165 = smul.u32 16, %s10
      $region28: #{tpu_custom_call.1} parent=23 // pred_fallthru
        _
      // Predicated region
      $region29: #{tpu_custom_call.1} parent=23 // pred_check
        %p166 = pneg %p58
      $region30: #{tpu_custom_call.1} parent=23 // pred_check_branch
        %168 = sbr.rel (%p166) target = $region32
      $region31: #{tpu_custom_call.1} parent=23 // pred_region
        %s169 = sadd.s32 %s10, 1
        %s170 = smul.u32 16, %s169
        %p171 = scmp.lt.s32.totalorder %s170, 63
        %s172 = scalar_select %p171, %s170, 63
        %s173 = smul.addr %s172, 8
        %s174 = scalar_lea.vmem %s1, %s173
        %s175 = sadd.s32 %s10, 1
        %s176 = smul.u32 16, %s175
      $region32: #{tpu_custom_call.1} parent=23 // pred_fallthru
        _
    $region24: #{tpu_custom_call.1} parent=5 // pred_fallthru
      _
    %p177 = scmp.le.s32.totalorder 1, %s10
    %p178 = scmp.lt.s32.totalorder %s10, 4
    %p179 = pnand %p177, %p178
    %p180 = pneg %p179
    // Predicated region
    $region33: #{tpu_custom_call.1} parent=5 // pred_check
      _
    $region34: #{tpu_custom_call.1} parent=5 // pred_check_branch
      %182 = sbr.rel (%p179) target = $region36
    $region35: #{tpu_custom_call.1} parent=5 // pred_region
      %s183 = ssub.s32 %s10, 1
      %s184 = smul.u32 16, %s15
      %p185 = scmp.lt.s32.totalorder %s184, 63
      %s186 = scalar_select %p185, %s184, 63
      %s187 = smul.addr %s186, 8
      %s188 = scalar_lea.vmem %s0, %s187
      %p189 = pneg %p36
      %p190 = pneg %p33
      %s191 = sadd.s32 %s15, 1
      %s192 = smul.u32 16, %s191
      %p193 = scmp.lt.s32.totalorder %s192, 63
      %s194 = scalar_select %p193, %s192, 63
      %s195 = smul.addr %s194, 8
      %s196 = scalar_lea.vmem %s1, %s195
      %p197 = pneg %p64
      %p198 = pneg %p61
      %p199 = pneg %p85
      %p200 = pneg %p82
      %p201 = pneg %p106
      %p202 = pneg %p103
      %p203 = pneg %p132
      %p204 = pneg %p129
      %s205 = smul.u32 16, %s15
      %p206 = scmp.lt.s32.totalorder %s205, 47
      %s207 = scalar_select %p206, %s205, 47
      %s208 = smul.addr %s207, 8
      %s209 = scalar_lea.vmem %s4, %s208
      %s210 = smul.u32 16, %s15
      %p211 = scmp.lt.s32.totalorder %s210, 63
      %s212 = scalar_select %p211, %s210, 63
      %s213 = smul.addr %s212, 8
      %s214 = scalar_lea.vmem %s0, %s213
      %s215 = smul.u32 16, %s15
      %s216 = sadd.s32 %s15, 1
      %s217 = smul.u32 16, %s216
      %p218 = scmp.lt.s32.totalorder %s217, 63
      %s219 = scalar_select %p218, %s217, 63
      %s220 = smul.addr %s219, 8
      %s221 = scalar_lea.vmem %s1, %s220
      %s222 = sadd.s32 %s15, 1
      %s223 = smul.u32 16, %s222
      %s224 = smul.u32 16, %s15
      %p225 = scmp.lt.s32.totalorder %s224, 47
      %s226 = scalar_select %p225, %s224, 47
      %s227 = smul.addr %s226, 8
      %s228 = scalar_lea.vmem %s4, %s227
      %s229 = smul.u32 16, %s15
      %v230 = vld [vmem:[%s214] sm:$0xff]
      %v231 = vld [vmem:[%s214 + $0x8] sm:$0xff]
      %v232 = vld [vmem:[%s214 + $0x10] sm:$0xff]
      %v233 = vld [vmem:[%s214 + $0x18] sm:$0xff]
      %v234 = vld [vmem:[%s214 + $0x20] sm:$0xff]
      %v235 = vld [vmem:[%s214 + $0x28] sm:$0xff]
      %v236 = vld [vmem:[%s214 + $0x30] sm:$0xff]
      %v237 = vld [vmem:[%s214 + $0x38] sm:$0xff]
      %v238 = vld [vmem:[%s214 + $0x40] sm:$0xff]
      %v239 = vld [vmem:[%s214 + $0x48] sm:$0xff]
      %v240 = vld [vmem:[%s214 + $0x50] sm:$0xff]
      %v241 = vld [vmem:[%s214 + $0x58] sm:$0xff]
      %v242 = vld [vmem:[%s214 + $0x60] sm:$0xff]
      %v243 = vld [vmem:[%s214 + $0x68] sm:$0xff]
      %v244 = vld [vmem:[%s214 + $0x70] sm:$0xff]
      %v245 = vld [vmem:[%s214 + $0x78] sm:$0xff]
      %v246 = vld [vmem:[%s221] sm:$0xff]
      %v247 = vld [vmem:[%s221 + $0x8] sm:$0xff]
      %v248 = vld [vmem:[%s221 + $0x10] sm:$0xff]
      %v249 = vld [vmem:[%s221 + $0x18] sm:$0xff]
      %v250 = vld [vmem:[%s221 + $0x20] sm:$0xff]
      %v251 = vld [vmem:[%s2] sm:$0xff]
      %v252 = vld [vmem:[%s2 + $0x8] sm:$0xff]
      %v253 = vld [vmem:[%s2 + $0x10] sm:$0xff]
      %v254 = vld [vmem:[%s2 + $0x18] sm:$0xff]
      %v255 = vld [vmem:[%s2 + $0x20] sm:$0xff]
      %v256 = vld [vmem:[%s2 + $0x28] sm:$0xff]
      %v257 = vld [vmem:[%s2 + $0x30] sm:$0xff]
      %v258 = vld [vmem:[%s2 + $0x38] sm:$0xff]
      %v259 = vld [vmem:[%s2 + $0x40] sm:$0xff]
      %vm277 = vcmask 1046528
      %v278 = vrot.slane %v230, 1
      %v279 = vrot.slane %v231, 1
      %v280 = vsel %vm277, %v278, %v279
      %v281 = vrot.slane %v232, 1
      %v282 = vsel %vm277, %v279, %v281
      %v283 = vrot.slane %v233, 1
      %v284 = vsel %vm277, %v281, %v283
      %v285 = vrot.slane %v234, 1
      %v286 = vsel %vm277, %v283, %v285
      %v287 = vrot.slane %v235, 1
      %v288 = vsel %vm277, %v285, %v287
      %v289 = vrot.slane %v236, 1
      %v290 = vsel %vm277, %v287, %v289
      %v291 = vrot.slane %v237, 1
      %v292 = vsel %vm277, %v289, %v291
      %v293 = vrot.slane %v238, 1
      %v294 = vsel %vm277, %v291, %v293
      %v295 = vrot.slane %v239, 1
      %v296 = vsel %vm277, %v293, %v295
      %v297 = vrot.slane %v240, 1
      %v298 = vsel %vm277, %v295, %v297
      %v299 = vrot.slane %v241, 1
      %v300 = vsel %vm277, %v297, %v299
      %v301 = vrot.slane %v242, 1
      %v302 = vsel %vm277, %v299, %v301
      %v303 = vrot.slane %v243, 1
      %v304 = vsel %vm277, %v301, %v303
      %v305 = vrot.slane %v244, 1
      %v306 = vsel %vm277, %v303, %v305
      %v307 = vrot.slane %v245, 1
      %v308 = vsel %vm277, %v305, %v307
      %v309 = vrot.slane %v246, 1
      %v310 = vsel %vm277, %v307, %v309
      %vm311 = vcmask 64512
      %v312 = vsel %vm311, %v280, 0
      %v314 = vsel %vm311, %v282, 0
      %v316 = vsel %vm311, %v284, 0
      %v318 = vsel %vm311, %v286, 0
      %v320 = vsel %vm311, %v288, 0
      %v322 = vsel %vm311, %v290, 0
      %v324 = vsel %vm311, %v292, 0
      %v326 = vsel %vm311, %v294, 0
      %v328 = vsel %vm311, %v296, 0
      %v330 = vsel %vm311, %v298, 0
      %v332 = vsel %vm311, %v300, 0
      %v334 = vsel %vm311, %v302, 0
      %v336 = vsel %vm311, %v304, 0
      %v338 = vsel %vm311, %v306, 0
      %v340 = vsel %vm311, %v308, 0
      %v342 = vsel %vm311, %v310, 0
      %344 = vmatprep.subr.mxu0 0.0
      %345 = vmatpush1.msra.mxu0 %v252
      %346 = vmatprep.subr.mxu0 0.0
      %347 = vmatpush1.msra.mxu0 0.0
      %348 = vmatprep.subr.mxu0 0.0
      %349 = vmatpush1.msra.mxu0 0.0
      %350 = vmatprep.subr.mxu0 0.0
      %351 = vmatpush1.msra.mxu0 0.0
      %352 = vmatprep.subr.mxu0 0.0
      %353 = vmatpush1.msra.mxu0 0.0
      %354 = vmatprep.subr.mxu0 0.0
      %355 = vmatpush1.msra.mxu0 0.0
      %356 = vmatprep.subr.mxu0 0.0
      %357 = vmatpush1.msra.mxu0 0.0
      %358 = vmatprep.subr.mxu0 0.0
      %359 = vmatpush1.msra.mxu0 0.0
      %360 = vmatprep.subr.mxu0 0.0
      %361 = vmatpush1.msra.mxu0 0.0
      %362 = vmatprep.subr.mxu0 0.0
      %363 = vmatpush1.msra.mxu0 0.0
      %364 = vmatprep.subr.mxu0 0.0
      %365 = vmatpush1.msra.mxu0 0.0
      %366 = vmatprep.subr.mxu0 0.0
      %367 = vmatpush1.msra.mxu0 0.0
      %368 = vmatprep.subr.mxu0 0.0
      %369 = vmatpush1.msra.mxu0 0.0
      %370 = vmatprep.subr.mxu0 0.0
      %371 = vmatpush1.msra.mxu0 0.0
      %372 = vmatprep.subr.mxu0 0.0
      %373 = vmatpush1.msra.mxu0 0.0
      %374 = vmatprep.subr.mxu0 0.0
      %375 = vmatpush1.msra.mxu0 0.0
      %376 = vmatprep.subr.mxu0 0.0
      %377 = vmatpush1.msra.mxu0 0.0
      %378 = vmatprep.subr.mxu0 0.0
      %379 = vmatpush1.msra.mxu0 0.0
      %380 = vmatprep.subr.mxu0 0.0
      %381 = vmatpush1.msra.mxu0 0.0
      %382 = vmatprep.subr.mxu0 0.0
      %383 = vmatpush1.msra.mxu0 0.0
      %384 = vmatprep.subr.mxu0 0.0
      %385 = vmatpush1.msra.mxu0 0.0
      %386 = vmatprep.subr.mxu0 0.0
      %387 = vmatpush1.msra.mxu0 0.0
      %388 = vmatprep.subr.mxu0 0.0
      %389 = vmatpush1.msra.mxu0 0.0
      %390 = vmatprep.subr.mxu0 0.0
      %391 = vmatpush1.msra.mxu0 0.0
      %392 = vmatprep.subr.mxu0 0.0
      %393 = vmatpush1.msra.mxu0 0.0
      %394 = vmatprep.subr.mxu0 0.0
      %395 = vmatpush1.msra.mxu0 0.0
      %396 = vmatprep.subr.mxu0 0.0
      %397 = vmatpush1.msra.mxu0 0.0
      %398 = vmatprep.subr.mxu0 0.0
      %399 = vmatpush1.msra.mxu0 0.0
      %400 = vmatprep.subr.mxu0 0.0
      %401 = vmatpush1.msra.mxu0 0.0
      %402 = vmatprep.subr.mxu0 0.0
      %403 = vmatpush1.msra.mxu0 0.0
      %404 = vmatprep.subr.mxu0 0.0
      %405 = vmatpush1.msra.mxu0 0.0
      %406 = vmatprep.subr.mxu0 0.0
      %407 = vmatpush1.msra.mxu0 0.0
      %408 = vmatprep.mubr.f32.mxu0 0.0
      %409 = vmatmul.mubr.f32.gmra.mrb[0].mxu0 %v312
      %v410 = vpop.f32.mrb[0].mxu0
      %v411 = vadd.f32 0.0, %v410
      %v412 = vpop.f32.mrb[0].mxu0
      %413 = vmatprep.mubr.f32.mxu0 0.0
      %414 = vmatmul.mubr.f32.gmra.mrb[0].mxu0 %v314
      %v415 = vpop.f32.mrb[0].mxu0
      %v416 = vadd.f32 0.0, %v415
      %v417 = vpop.f32.mrb[0].mxu0
      %418 = vmatprep.mubr.f32.mxu0 0.0
      %419 = vmatmul.mubr.f32.gmra.mrb[0].mxu0 %v316
      %v420 = vpop.f32.mrb[0].mxu0
      %v421 = vadd.f32 0.0, %v420
      %v422 = vpop.f32.mrb[0].mxu0
      %423 = vmatprep.mubr.f32.mxu0 0.0
      %424 = vmatmul.mubr.f32.gmra.mrb[0].mxu0 %v318
      %v425 = vpop.f32.mrb[0].mxu0
      %v426 = vadd.f32 0.0, %v425
      %v427 = vpop.f32.mrb[0].mxu0
      %428 = vmatprep.mubr.f32.mxu0 0.0
      %429 = vmatmul.mubr.f32.gmra.mrb[0].mxu0 %v320
      %v430 = vpop.f32.mrb[0].mxu0
      %v431 = vadd.f32 0.0, %v430
      %v432 = vpop.f32.mrb[0].mxu0
      %433 = vmatprep.mubr.f32.mxu0 0.0
      %434 = vmatmul.mubr.f32.gmra.mrb[0].mxu0 %v322
      %v435 = vpop.f32.mrb[0].mxu0
      %v436 = vadd.f32 0.0, %v435
      %v437 = vpop.f32.mrb[0].mxu0
      %438 = vmatprep.mubr.f32.mxu0 0.0
      %439 = vmatmul.mubr.f32.gmra.mrb[0].mxu0 %v324
      %v440 = vpop.f32.mrb[0].mxu0
      %v441 = vadd.f32 0.0, %v440
      %v442 = vpop.f32.mrb[0].mxu0
      %443 = vmatprep.mubr.f32.mxu0 0.0
      %444 = vmatmul.mubr.f32.gmra.mrb[0].mxu0 %v326
      %v445 = vpop.f32.mrb[0].mxu0
      %v446 = vadd.f32 0.0, %v445
      %v447 = vpop.f32.mrb[0].mxu0
      %448 = vmatprep.mubr.f32.mxu0 0.0
      %449 = vmatmul.mubr.f32.gmra.mrb[0].mxu0 %v328
      %v450 = vpop.f32.mrb[0].mxu0
      %v451 = vadd.f32 0.0, %v450
      %v452 = vpop.f32.mrb[0].mxu0
      %453 = vmatprep.mubr.f32.mxu0 0.0
      %454 = vmatmul.mubr.f32.gmra.mrb[0].mxu0 %v330
      %v455 = vpop.f32.mrb[0].mxu0
      %v456 = vadd.f32 0.0, %v455
      %v457 = vpop.f32.mrb[0].mxu0
      %458 = vmatprep.mubr.f32.mxu0 0.0
      %459 = vmatmul.mubr.f32.gmra.mrb[0].mxu0 %v332
      %v460 = vpop.f32.mrb[0].mxu0
      %v461 = vadd.f32 0.0, %v460
      %v462 = vpop.f32.mrb[0].mxu0
      %463 = vmatprep.mubr.f32.mxu0 0.0
      %464 = vmatmul.mubr.f32.gmra.mrb[0].mxu0 %v334
      %v465 = vpop.f32.mrb[0].mxu0
      %v466 = vadd.f32 0.0, %v465
      %v467 = vpop.f32.mrb[0].mxu0
      %468 = vmatprep.mubr.f32.mxu0 0.0
      %469 = vmatmul.mubr.f32.gmra.mrb[0].mxu0 %v336
      %v470 = vpop.f32.mrb[0].mxu0
      %v471 = vadd.f32 0.0, %v470
      %v472 = vpop.f32.mrb[0].mxu0
      %473 = vmatprep.mubr.f32.mxu0 0.0
      %474 = vmatmul.mubr.f32.gmra.mrb[0].mxu0 %v338
      %v475 = vpop.f32.mrb[0].mxu0
      %v476 = vadd.f32 0.0, %v475
      %v477 = vpop.f32.mrb[0].mxu0
      %478 = vmatprep.mubr.f32.mxu0 0.0
      %479 = vmatmul.mubr.f32.gmra.mrb[0].mxu0 %v340
      %v480 = vpop.f32.mrb[0].mxu0
      %v481 = vadd.f32 0.0, %v480
      %v482 = vpop.f32.mrb[0].mxu0
      %483 = vmatprep.mubr.f32.mxu0 0.0
      %484 = vmatmul.mubr.f32.gmra.mrb[0].mxu0 %v342
      %v485 = vpop.f32.mrb[0].mxu0
      %v486 = vadd.f32 0.0, %v485
      %v487 = vpop.f32.mrb[0].mxu0
      %488 = vdwg.mxu0
      %v489 = vsel %vm311, %v230, 0
      %v491 = vsel %vm311, %v231, 0
      %v493 = vsel %vm311, %v232, 0
      %v495 = vsel %vm311, %v233, 0
      %v497 = vsel %vm311, %v234, 0
      %v499 = vsel %vm311, %v235, 0
      %v501 = vsel %vm311, %v236, 0
      %v503 = vsel %vm311, %v237, 0
      %v505 = vsel %vm311, %v238, 0
      %v507 = vsel %vm311, %v239, 0
      %v509 = vsel %vm311, %v240, 0
      %v511 = vsel %vm311, %v241, 0
      %v513 = vsel %vm311, %v242, 0
      %v515 = vsel %vm311, %v243, 0
      %v517 = vsel %vm311, %v244, 0
      %v519 = vsel %vm311, %v245, 0
      %521 = vmatprep.subr.mxu0 0.0
      %522 = vmatpush1.msra.mxu0 %v251
      %523 = vmatprep.subr.mxu0 0.0
      %524 = vmatpush1.msra.mxu0 0.0
      %525 = vmatprep.subr.mxu0 0.0
      %526 = vmatpush1.msra.mxu0 0.0
      %527 = vmatprep.subr.mxu0 0.0
      %528 = vmatpush1.msra.mxu0 0.0
      %529 = vmatprep.subr.mxu0 0.0
      %530 = vmatpush1.msra.mxu0 0.0
      %531 = vmatprep.subr.mxu0 0.0
      %532 = vmatpush1.msra.mxu0 0.0
      %533 = vmatprep.subr.mxu0 0.0
      %534 = vmatpush1.msra.mxu0 0.0
      %535 = vmatprep.subr.mxu0 0.0
      %536 = vmatpush1.msra.mxu0 0.0
      %537 = vmatprep.subr.mxu0 0.0
      %538 = vmatpush1.msra.mxu0 0.0
      %539 = vmatprep.subr.mxu0 0.0
      %540 = vmatpush1.msra.mxu0 0.0
      %541 = vmatprep.subr.mxu0 0.0
      %542 = vmatpush1.msra.mxu0 0.0
      %543 = vmatprep.subr.mxu0 0.0
      %544 = vmatpush1.msra.mxu0 0.0
      %545 = vmatprep.subr.mxu0 0.0
      %546 = vmatpush1.msra.mxu0 0.0
      %547 = vmatprep.subr.mxu0 0.0
      %548 = vmatpush1.msra.mxu0 0.0
      %549 = vmatprep.subr.mxu0 0.0
      %550 = vmatpush1.msra.mxu0 0.0
      %551 = vmatprep.subr.mxu0 0.0
      %552 = vmatpush1.msra.mxu0 0.0
      %553 = vmatprep.subr.mxu0 0.0
      %554 = vmatpush1.msra.mxu0 0.0
      %555 = vmatprep.subr.mxu0 0.0
      %556 = vmatpush1.msra.mxu0 0.0
      %557 = vmatprep.subr.mxu0 0.0
      %558 = vmatpush1.msra.mxu0 0.0
      %559 = vmatprep.subr.mxu0 0.0
      %560 = vmatpush1.msra.mxu0 0.0
      %561 = vmatprep.subr.mxu0 0.0
      %562 = vmatpush1.msra.mxu0 0.0
      %563 = vmatprep.subr.mxu0 0.0
      %564 = vmatpush1.msra.mxu0 0.0
      %565 = vmatprep.subr.mxu0 0.0
      %566 = vmatpush1.msra.mxu0 0.0
      %567 = vmatprep.subr.mxu0 0.0
      %568 = vmatpush1.msra.mxu0 0.0
      %569 = vmatprep.subr.mxu0 0.0
      %570 = vmatpush1.msra.mxu0 0.0
      %571 = vmatprep.subr.mxu0 0.0
      %572 = vmatpush1.msra.mxu0 0.0
      %573 = vmatprep.subr.mxu0 0.0
      %574 = vmatpush1.msra.mxu0 0.0
      %575 = vmatprep.subr.mxu0 0.0
      %576 = vmatpush1.msra.mxu0 0.0
      %577 = vmatprep.subr.mxu0 0.0
      %578 = vmatpush1.msra.mxu0 0.0
      %579 = vmatprep.subr.mxu0 0.0
      %580 = vmatpush1.msra.mxu0 0.0
      %581 = vmatprep.subr.mxu0 0.0
      %582 = vmatpush1.msra.mxu0 0.0
      %583 = vmatprep.subr.mxu0 0.0
      %584 = vmatpush1.msra.mxu0 0.0
      %585 = vmatprep.mubr.f32.mxu0 0.0
      %586 = vmatmul.mubr.f32.gmra.mrb[0].mxu0 %v489
      %v587 = vpop.f32.mrb[0].mxu0
      %v588 = vadd.f32 %v411, %v587
      %v589 = vpop.f32.mrb[0].mxu0
      %590 = vmatprep.mubr.f32.mxu0 0.0
      %591 = vmatmul.mubr.f32.gmra.mrb[0].mxu0 %v491
      %v592 = vpop.f32.mrb[0].mxu0
      %v593 = vadd.f32 %v416, %v592
      %v594 = vpop.f32.mrb[0].mxu0
      %595 = vmatprep.mubr.f32.mxu0 0.0
      %596 = vmatmul.mubr.f32.gmra.mrb[0].mxu0 %v493
      %v597 = vpop.f32.mrb[0].mxu0
      %v598 = vadd.f32 %v421, %v597
      %v599 = vpop.f32.mrb[0].mxu0
      %600 = vmatprep.mubr.f32.mxu0 0.0
      %601 = vmatmul.mubr.f32.gmra.mrb[0].mxu0 %v495
      %v602 = vpop.f32.mrb[0].mxu0
      %v603 = vadd.f32 %v426, %v602
      %v604 = vpop.f32.mrb[0].mxu0
      %605 = vmatprep.mubr.f32.mxu0 0.0
      %606 = vmatmul.mubr.f32.gmra.mrb[0].mxu0 %v497
      %v607 = vpop.f32.mrb[0].mxu0
      %v608 = vadd.f32 %v431, %v607
      %v609 = vpop.f32.mrb[0].mxu0
      %610 = vmatprep.mubr.f32.mxu0 0.0
      %611 = vmatmul.mubr.f32.gmra.mrb[0].mxu0 %v499
      %v612 = vpop.f32.mrb[0].mxu0
      %v613 = vadd.f32 %v436, %v612
      %v614 = vpop.f32.mrb[0].mxu0
      %615 = vmatprep.mubr.f32.mxu0 0.0
      %616 = vmatmul.mubr.f32.gmra.mrb[0].mxu0 %v501
      %v617 = vpop.f32.mrb[0].mxu0
      %v618 = vadd.f32 %v441, %v617
      %v619 = vpop.f32.mrb[0].mxu0
      %620 = vmatprep.mubr.f32.mxu0 0.0
      %621 = vmatmul.mubr.f32.gmra.mrb[0].mxu0 %v503
      %v622 = vpop.f32.mrb[0].mxu0
      %v623 = vadd.f32 %v446, %v622
      %v624 = vpop.f32.mrb[0].mxu0
      %625 = vmatprep.mubr.f32.mxu0 0.0
      %626 = vmatmul.mubr.f32.gmra.mrb[0].mxu0 %v505
      %v627 = vpop.f32.mrb[0].mxu0
      %v628 = vadd.f32 %v451, %v627
      %v629 = vpop.f32.mrb[0].mxu0
      %630 = vmatprep.mubr.f32.mxu0 0.0
      %631 = vmatmul.mubr.f32.gmra.mrb[0].mxu0 %v507
      %v632 = vpop.f32.mrb[0].mxu0
      %v633 = vadd.f32 %v456, %v632
      %v634 = vpop.f32.mrb[0].mxu0
      %635 = vmatprep.mubr.f32.mxu0 0.0
      %636 = vmatmul.mubr.f32.gmra.mrb[0].mxu0 %v509
      %v637 = vpop.f32.mrb[0].mxu0
      %v638 = vadd.f32 %v461, %v637
      %v639 = vpop.f32.mrb[0].mxu0
      %640 = vmatprep.mubr.f32.mxu0 0.0
      %641 = vmatmul.mubr.f32.gmra.mrb[0].mxu0 %v511
      %v642 = vpop.f32.mrb[0].mxu0
      %v643 = vadd.f32 %v466, %v642
      %v644 = vpop.f32.mrb[0].mxu0
      %645 = vmatprep.mubr.f32.mxu0 0.0
      %646 = vmatmul.mubr.f32.gmra.mrb[0].mxu0 %v513
      %v647 = vpop.f32.mrb[0].mxu0
      %v648 = vadd.f32 %v471, %v647
      %v649 = vpop.f32.mrb[0].mxu0
      %650 = vmatprep.mubr.f32.mxu0 0.0
      %651 = vmatmul.mubr.f32.gmra.mrb[0].mxu0 %v515
      %v652 = vpop.f32.mrb[0].mxu0
      %v653 = vadd.f32 %v476, %v652
      %v654 = vpop.f32.mrb[0].mxu0
      %655 = vmatprep.mubr.f32.mxu0 0.0
      %656 = vmatmul.mubr.f32.gmra.mrb[0].mxu0 %v517
      %v657 = vpop.f32.mrb[0].mxu0
      %v658 = vadd.f32 %v481, %v657
      %v659 = vpop.f32.mrb[0].mxu0
      %660 = vmatprep.mubr.f32.mxu0 0.0
      %661 = vmatmul.mubr.f32.gmra.mrb[0].mxu0 %v519
      %v662 = vpop.f32.mrb[0].mxu0
      %v663 = vadd.f32 %v486, %v662
      %v664 = vpop.f32.mrb[0].mxu0
      %665 = vdwg.mxu0
      %vm666 = vcmask 1045504
      %v667 = vrot.slane %v230, 2
      %v668 = vrot.slane %v231, 2
      %v669 = vsel %vm666, %v667, %v668
      %v670 = vrot.slane %v232, 2
      %v671 = vsel %vm666, %v668, %v670
      %v672 = vrot.slane %v233, 2
      %v673 = vsel %vm666, %v670, %v672
      %v674 = vrot.slane %v234, 2
      %v675 = vsel %vm666, %v672, %v674
      %v676 = vrot.slane %v235, 2
      %v677 = vsel %vm666, %v674, %v676
      %v678 = vrot.slane %v236, 2
      %v679 = vsel %vm666, %v676, %v678
      %v680 = vrot.slane %v237, 2
      %v681 = vsel %vm666, %v678, %v680
      %v682 = vrot.slane %v238, 2
      %v683 = vsel %vm666, %v680, %v682
      %v684 = vrot.slane %v239, 2
      %v685 = vsel %vm666, %v682, %v684
      %v686 = vrot.slane %v240, 2
      %v687 = vsel %vm666, %v684, %v686
      %v688 = vrot.slane %v241, 2
      %v689 = vsel %vm666, %v686, %v688
      %v690 = vrot.slane %v242, 2
      %v691 = vsel %vm666, %v688, %v690
      %v692 = vrot.slane %v243, 2
      %v693 = vsel %vm666, %v690, %v692
      %v694 = vrot.slane %v244, 2
      %v695 = vsel %vm666, %v692, %v694
      %v696 = vrot.slane %v245, 2
      %v697 = vsel %vm666, %v694, %v696
      %v698 = vrot.slane %v246, 2
      %v699 = vsel %vm666, %v696, %v698
      %v700 = vsel %vm311, %v669, 0
      %v702 = vsel %vm311, %v671, 0
      %v704 = vsel %vm311, %v673, 0
      %v706 = vsel %vm311, %v675, 0
      %v708 = vsel %vm311, %v677, 0
      %v710 = vsel %vm311, %v679, 0
      %v712 = vsel %vm311, %v681, 0
      %v714 = vsel %vm311, %v683, 0
      %v716 = vsel %vm311, %v685, 0
      %v718 = vsel %vm311, %v687, 0
      %v720 = vsel %vm311, %v689, 0
      %v722 = vsel %vm311, %v691, 0
      %v724 = vsel %vm311, %v693, 0
      %v726 = vsel %vm311, %v695, 0
      %v728 = vsel %vm311, %v697, 0
      %v730 = vsel %vm311, %v699, 0
      %732 = vmatprep.subr.mxu0 0.0
      %733 = vmatpush1.msra.mxu0 %v253
      %734 = vmatprep.subr.mxu0 0.0
      %735 = vmatpush1.msra.mxu0 0.0
      %736 = vmatprep.subr.mxu0 0.0
      %737 = vmatpush1.msra.mxu0 0.0
      %738 = vmatprep.subr.mxu0 0.0
      %739 = vmatpush1.msra.mxu0 0.0
      %740 = vmatprep.subr.mxu0 0.0
      %741 = vmatpush1.msra.mxu0 0.0
      %742 = vmatprep.subr.mxu0 0.0
      %743 = vmatpush1.msra.mxu0 0.0
      %744 = vmatprep.subr.mxu0 0.0
      %745 = vmatpush1.msra.mxu0 0.0
      %746 = vmatprep.subr.mxu0 0.0
      %747 = vmatpush1.msra.mxu0 0.0
      %748 = vmatprep.subr.mxu0 0.0
      %749 = vmatpush1.msra.mxu0 0.0
      %750 = vmatprep.subr.mxu0 0.0
      %751 = vmatpush1.msra.mxu0 0.0
      %752 = vmatprep.subr.mxu0 0.0
      %753 = vmatpush1.msra.mxu0 0.0
      %754 = vmatprep.subr.mxu0 0.0
      %755 = vmatpush1.msra.mxu0 0.0
      %756 = vmatprep.subr.mxu0 0.0
      %757 = vmatpush1.msra.mxu0 0.0
      %758 = vmatprep.subr.mxu0 0.0
      %759 = vmatpush1.msra.mxu0 0.0
      %760 = vmatprep.subr.mxu0 0.0
      %761 = vmatpush1.msra.mxu0 0.0
      %762 = vmatprep.subr.mxu0 0.0
      %763 = vmatpush1.msra.mxu0 0.0
      %764 = vmatprep.subr.mxu0 0.0
      %765 = vmatpush1.msra.mxu0 0.0
      %766 = vmatprep.subr.mxu0 0.0
      %767 = vmatpush1.msra.mxu0 0.0
      %768 = vmatprep.subr.mxu0 0.0
      %769 = vmatpush1.msra.mxu0 0.0
      %770 = vmatprep.subr.mxu0 0.0
      %771 = vmatpush1.msra.mxu0 0.0
      %772 = vmatprep.subr.mxu0 0.0
      %773 = vmatpush1.msra.mxu0 0.0
      %774 = vmatprep.subr.mxu0 0.0
      %775 = vmatpush1.msra.mxu0 0.0
      %776 = vmatprep.subr.mxu0 0.0
      %777 = vmatpush1.msra.mxu0 0.0
      %778 = vmatprep.subr.mxu0 0.0
      %779 = vmatpush1.msra.mxu0 0.0
      %780 = vmatprep.subr.mxu0 0.0
      %781 = vmatpush1.msra.mxu0 0.0
      %782 = vmatprep.subr.mxu0 0.0
      %783 = vmatpush1.msra.mxu0 0.0
      %784 = vmatprep.subr.mxu0 0.0
      %785 = vmatpush1.msra.mxu0 0.0
      %786 = vmatprep.subr.mxu0 0.0
      %787 = vmatpush1.msra.mxu0 0.0
      %788 = vmatprep.subr.mxu0 0.0
      %789 = vmatpush1.msra.mxu0 0.0
      %790 = vmatprep.subr.mxu0 0.0
      %791 = vmatpush1.msra.mxu0 0.0
      %792 = vmatprep.subr.mxu0 0.0
      %793 = vmatpush1.msra.mxu0 0.0
      %794 = vmatprep.subr.mxu0 0.0
      %795 = vmatpush1.msra.mxu0 0.0
      %796 = vmatprep.mubr.f32.mxu0 0.0
      %797 = vmatmul.mubr.f32.gmra.mrb[0].mxu0 %v700
      %v798 = vpop.f32.mrb[0].mxu0
      %v799 = vadd.f32 0.0, %v798
      %v800 = vpop.f32.mrb[0].mxu0
      %801 = vmatprep.mubr.f32.mxu0 0.0
      %802 = vmatmul.mubr.f32.gmra.mrb[0].mxu0 %v702
      %v803 = vpop.f32.mrb[0].mxu0
      %v804 = vadd.f32 0.0, %v803
      %v805 = vpop.f32.mrb[0].mxu0
      %806 = vmatprep.mubr.f32.mxu0 0.0
      %807 = vmatmul.mubr.f32.gmra.mrb[0].mxu0 %v704
      %v808 = vpop.f32.mrb[0].mxu0
      %v809 = vadd.f32 0.0, %v808
      %v810 = vpop.f32.mrb[0].mxu0
      %811 = vmatprep.mubr.f32.mxu0 0.0
      %812 = vmatmul.mubr.f32.gmra.mrb[0].mxu0 %v706
      %v813 = vpop.f32.mrb[0].mxu0
      %v814 = vadd.f32 0.0, %v813
      %v815 = vpop.f32.mrb[0].mxu0
      %816 = vmatprep.mubr.f32.mxu0 0.0
      %817 = vmatmul.mubr.f32.gmra.mrb[0].mxu0 %v708
      %v818 = vpop.f32.mrb[0].mxu0
      %v819 = vadd.f32 0.0, %v818
      %v820 = vpop.f32.mrb[0].mxu0
      %821 = vmatprep.mubr.f32.mxu0 0.0
      %822 = vmatmul.mubr.f32.gmra.mrb[0].mxu0 %v710
      %v823 = vpop.f32.mrb[0].mxu0
      %v824 = vadd.f32 0.0, %v823
      %v825 = vpop.f32.mrb[0].mxu0
      %826 = vmatprep.mubr.f32.mxu0 0.0
      %827 = vmatmul.mubr.f32.gmra.mrb[0].mxu0 %v712
      %v828 = vpop.f32.mrb[0].mxu0
      %v829 = vadd.f32 0.0, %v828
      %v830 = vpop.f32.mrb[0].mxu0
      %831 = vmatprep.mubr.f32.mxu0 0.0
      %832 = vmatmul.mubr.f32.gmra.mrb[0].mxu0 %v714
      %v833 = vpop.f32.mrb[0].mxu0
      %v834 = vadd.f32 0.0, %v833
      %v835 = vpop.f32.mrb[0].mxu0
      %836 = vmatprep.mubr.f32.mxu0 0.0
      %837 = vmatmul.mubr.f32.gmra.mrb[0].mxu0 %v716
      %v838 = vpop.f32.mrb[0].mxu0
      %v839 = vadd.f32 0.0, %v838
      %v840 = vpop.f32.mrb[0].mxu0
      %841 = vmatprep.mubr.f32.mxu0 0.0
      %842 = vmatmul.mubr.f32.gmra.mrb[0].mxu0 %v718
      %v843 = vpop.f32.mrb[0].mxu0
      %v844 = vadd.f32 0.0, %v843
      %v845 = vpop.f32.mrb[0].mxu0
      %846 = vmatprep.mubr.f32.mxu0 0.0
      %847 = vmatmul.mubr.f32.gmra.mrb[0].mxu0 %v720
      %v848 = vpop.f32.mrb[0].mxu0
      %v849 = vadd.f32 0.0, %v848
      %v850 = vpop.f32.mrb[0].mxu0
      %851 = vmatprep.mubr.f32.mxu0 0.0
      %852 = vmatmul.mubr.f32.gmra.mrb[0].mxu0 %v722
      %v853 = vpop.f32.mrb[0].mxu0
      %v854 = vadd.f32 0.0, %v853
      %v855 = vpop.f32.mrb[0].mxu0
      %856 = vmatprep.mubr.f32.mxu0 0.0
      %857 = vmatmul.mubr.f32.gmra.mrb[0].mxu0 %v724
      %v858 = vpop.f32.mrb[0].mxu0
      %v859 = vadd.f32 0.0, %v858
      %v860 = vpop.f32.mrb[0].mxu0
      %861 = vmatprep.mubr.f32.mxu0 0.0
      %862 = vmatmul.mubr.f32.gmra.mrb[0].mxu0 %v726
      %v863 = vpop.f32.mrb[0].mxu0
      %v864 = vadd.f32 0.0, %v863
      %v865 = vpop.f32.mrb[0].mxu0
      %866 = vmatprep.mubr.f32.mxu0 0.0
      %867 = vmatmul.mubr.f32.gmra.mrb[0].mxu0 %v728
      %v868 = vpop.f32.mrb[0].mxu0
      %v869 = vadd.f32 0.0, %v868
      %v870 = vpop.f32.mrb[0].mxu0
      %871 = vmatprep.mubr.f32.mxu0 0.0
      %872 = vmatmul.mubr.f32.gmra.mrb[0].mxu0 %v730
      %v873 = vpop.f32.mrb[0].mxu0
      %v874 = vadd.f32 0.0, %v873
      %v875 = vpop.f32.mrb[0].mxu0
      %876 = vdwg.mxu0
      %v877 = vadd.f32 %v588, %v799
      %v878 = vadd.f32 %v593, %v804
      %v879 = vadd.f32 %v598, %v809
      %v880 = vadd.f32 %v603, %v814
      %v881 = vadd.f32 %v608, %v819
      %v882 = vadd.f32 %v613, %v824
      %v883 = vadd.f32 %v618, %v829
      %v884 = vadd.f32 %v623, %v834
      %v885 = vadd.f32 %v628, %v839
      %v886 = vadd.f32 %v633, %v844
      %v887 = vadd.f32 %v638, %v849
      %v888 = vadd.f32 %v643, %v854
      %v889 = vadd.f32 %v648, %v859
      %v890 = vadd.f32 %v653, %v864
      %v891 = vadd.f32 %v658, %v869
      %v892 = vadd.f32 %v663, %v874
      %v893 = vsel %vm311, %v246, 0
      %v896 = vsel %vm311, %v247, 0
      %898 = vmatprep.subr.mxu0 0.0
      %899 = vmatpush1.msra.mxu0 %v254
      %900 = vmatprep.subr.mxu0 0.0
      %901 = vmatpush1.msra.mxu0 0.0
      %902 = vmatprep.subr.mxu0 0.0
      %903 = vmatpush1.msra.mxu0 0.0
      %904 = vmatprep.subr.mxu0 0.0
      %905 = vmatpush1.msra.mxu0 0.0
      %906 = vmatprep.subr.mxu0 0.0
      %907 = vmatpush1.msra.mxu0 0.0
      %908 = vmatprep.subr.mxu0 0.0
      %909 = vmatpush1.msra.mxu0 0.0
      %910 = vmatprep.subr.mxu0 0.0
      %911 = vmatpush1.msra.mxu0 0.0
      %912 = vmatprep.subr.mxu0 0.0
      %913 = vmatpush1.msra.mxu0 0.0
      %914 = vmatprep.subr.mxu0 0.0
      %915 = vmatpush1.msra.mxu0 0.0
      %916 = vmatprep.subr.mxu0 0.0
      %917 = vmatpush1.msra.mxu0 0.0
      %918 = vmatprep.subr.mxu0 0.0
      %919 = vmatpush1.msra.mxu0 0.0
      %920 = vmatprep.subr.mxu0 0.0
      %921 = vmatpush1.msra.mxu0 0.0
      %922 = vmatprep.subr.mxu0 0.0
      %923 = vmatpush1.msra.mxu0 0.0
      %924 = vmatprep.subr.mxu0 0.0
      %925 = vmatpush1.msra.mxu0 0.0
      %926 = vmatprep.subr.mxu0 0.0
      %927 = vmatpush1.msra.mxu0 0.0
      %928 = vmatprep.subr.mxu0 0.0
      %929 = vmatpush1.msra.mxu0 0.0
      %930 = vmatprep.subr.mxu0 0.0
      %931 = vmatpush1.msra.mxu0 0.0
      %932 = vmatprep.subr.mxu0 0.0
      %933 = vmatpush1.msra.mxu0 0.0
      %934 = vmatprep.subr.mxu0 0.0
      %935 = vmatpush1.msra.mxu0 0.0
      %936 = vmatprep.subr.mxu0 0.0
      %937 = vmatpush1.msra.mxu0 0.0
      %938 = vmatprep.subr.mxu0 0.0
      %939 = vmatpush1.msra.mxu0 0.0
      %940 = vmatprep.subr.mxu0 0.0
      %941 = vmatpush1.msra.mxu0 0.0
      %942 = vmatprep.subr.mxu0 0.0
      %943 = vmatpush1.msra.mxu0 0.0
      %944 = vmatprep.subr.mxu0 0.0
      %945 = vmatpush1.msra.mxu0 0.0
      %946 = vmatprep.subr.mxu0 0.0
      %947 = vmatpush1.msra.mxu0 0.0
      %948 = vmatprep.subr.mxu0 0.0
      %949 = vmatpush1.msra.mxu0 0.0
      %950 = vmatprep.subr.mxu0 0.0
      %951 = vmatpush1.msra.mxu0 0.0
      %952 = vmatprep.subr.mxu0 0.0
      %953 = vmatpush1.msra.mxu0 0.0
      %954 = vmatprep.subr.mxu0 0.0
      %955 = vmatpush1.msra.mxu0 0.0
      %956 = vmatprep.subr.mxu0 0.0
      %957 = vmatpush1.msra.mxu0 0.0
      %958 = vmatprep.subr.mxu0 0.0
      %959 = vmatpush1.msra.mxu0 0.0
      %960 = vmatprep.subr.mxu0 0.0
      %961 = vmatpush1.msra.mxu0 0.0
      %962 = vmatprep.mubr.f32.mxu0 0.0
      %963 = vmatmul.mubr.f32.gmra.mrb[0].mxu0 %v493
      %v964 = vpop.f32.mrb[0].mxu0
      %v965 = vadd.f32 0.0, %v964
      %v966 = vpop.f32.mrb[0].mxu0
      %967 = vmatprep.mubr.f32.mxu0 0.0
      %968 = vmatmul.mubr.f32.gmra.mrb[0].mxu0 %v495
      %v969 = vpop.f32.mrb[0].mxu0
      %v970 = vadd.f32 0.0, %v969
      %v971 = vpop.f32.mrb[0].mxu0
      %972 = vmatprep.mubr.f32.mxu0 0.0
      %973 = vmatmul.mubr.f32.gmra.mrb[0].mxu0 %v497
      %v974 = vpop.f32.mrb[0].mxu0
      %v975 = vadd.f32 0.0, %v974
      %v976 = vpop.f32.mrb[0].mxu0
      %977 = vmatprep.mubr.f32.mxu0 0.0
      %978 = vmatmul.mubr.f32.gmra.mrb[0].mxu0 %v499
      %v979 = vpop.f32.mrb[0].mxu0
      %v980 = vadd.f32 0.0, %v979
      %v981 = vpop.f32.mrb[0].mxu0
      %982 = vmatprep.mubr.f32.mxu0 0.0
      %983 = vmatmul.mubr.f32.gmra.mrb[0].mxu0 %v501
      %v984 = vpop.f32.mrb[0].mxu0
      %v985 = vadd.f32 0.0, %v984
      %v986 = vpop.f32.mrb[0].mxu0
      %987 = vmatprep.mubr.f32.mxu0 0.0
      %988 = vmatmul.mubr.f32.gmra.mrb[0].mxu0 %v503
      %v989 = vpop.f32.mrb[0].mxu0
      %v990 = vadd.f32 0.0, %v989
      %v991 = vpop.f32.mrb[0].mxu0
      %992 = vmatprep.mubr.f32.mxu0 0.0
      %993 = vmatmul.mubr.f32.gmra.mrb[0].mxu0 %v505
      %v994 = vpop.f32.mrb[0].mxu0
      %v995 = vadd.f32 0.0, %v994
      %v996 = vpop.f32.mrb[0].mxu0
      %997 = vmatprep.mubr.f32.mxu0 0.0
      %998 = vmatmul.mubr.f32.gmra.mrb[0].mxu0 %v507
      %v999 = vpop.f32.mrb[0].mxu0
      %v1000 = vadd.f32 0.0, %v999
      %v1001 = vpop.f32.mrb[0].mxu0
      %1002 = vmatprep.mubr.f32.mxu0 0.0
      %1003 = vmatmul.mubr.f32.gmra.mrb[0].mxu0 %v509
      %v1004 = vpop.f32.mrb[0].mxu0
      %v1005 = vadd.f32 0.0, %v1004
      %v1006 = vpop.f32.mrb[0].mxu0
      %1007 = vmatprep.mubr.f32.mxu0 0.0
      %1008 = vmatmul.mubr.f32.gmra.mrb[0].mxu0 %v511
      %v1009 = vpop.f32.mrb[0].mxu0
      %v1010 = vadd.f32 0.0, %v1009
      %v1011 = vpop.f32.mrb[0].mxu0
      %1012 = vmatprep.mubr.f32.mxu0 0.0
      %1013 = vmatmul.mubr.f32.gmra.mrb[0].mxu0 %v513
      %v1014 = vpop.f32.mrb[0].mxu0
      %v1015 = vadd.f32 0.0, %v1014
      %v1016 = vpop.f32.mrb[0].mxu0
      %1017 = vmatprep.mubr.f32.mxu0 0.0
      %1018 = vmatmul.mubr.f32.gmra.mrb[0].mxu0 %v515
      %v1019 = vpop.f32.mrb[0].mxu0
      %v1020 = vadd.f32 0.0, %v1019
      %v1021 = vpop.f32.mrb[0].mxu0
      %1022 = vmatprep.mubr.f32.mxu0 0.0
      %1023 = vmatmul.mubr.f32.gmra.mrb[0].mxu0 %v517
      %v1024 = vpop.f32.mrb[0].mxu0
      %v1025 = vadd.f32 0.0, %v1024
      %v1026 = vpop.f32.mrb[0].mxu0
      %1027 = vmatprep.mubr.f32.mxu0 0.0
      %1028 = vmatmul.mubr.f32.gmra.mrb[0].mxu0 %v519
      %v1029 = vpop.f32.mrb[0].mxu0
      %v1030 = vadd.f32 0.0, %v1029
      %v1031 = vpop.f32.mrb[0].mxu0
      %1032 = vmatprep.mubr.f32.mxu0 0.0
      %1033 = vmatmul.mubr.f32.gmra.mrb[0].mxu0 %v893
      %v1034 = vpop.f32.mrb[0].mxu0
      %v1035 = vadd.f32 0.0, %v1034
      %v1036 = vpop.f32.mrb[0].mxu0
      %1037 = vmatprep.mubr.f32.mxu0 0.0
      %1038 = vmatmul.mubr.f32.gmra.mrb[0].mxu0 %v896
      %v1039 = vpop.f32.mrb[0].mxu0
      %v1040 = vadd.f32 0.0, %v1039
      %v1041 = vpop.f32.mrb[0].mxu0
      %1042 = vdwg.mxu0
      %v1043 = vadd.f32 %v877, %v965
      %v1044 = vadd.f32 %v878, %v970
      %v1045 = vadd.f32 %v879, %v975
      %v1046 = vadd.f32 %v880, %v980
      %v1047 = vadd.f32 %v881, %v985
      %v1048 = vadd.f32 %v882, %v990
      %v1049 = vadd.f32 %v883, %v995
      %v1050 = vadd.f32 %v884, %v1000
      %v1051 = vadd.f32 %v885, %v1005
      %v1052 = vadd.f32 %v886, %v1010
      %v1053 = vadd.f32 %v887, %v1015
      %v1054 = vadd.f32 %v888, %v1020
      %v1055 = vadd.f32 %v889, %v1025
      %v1056 = vadd.f32 %v890, %v1030
      %v1057 = vadd.f32 %v891, %v1035
      %v1058 = vadd.f32 %v892, %v1040
      %v1060 = vrot.slane %v247, 1
      %v1061 = vsel %vm277, %v309, %v1060
      %v1062 = vrot.slane %v248, 1
      %v1063 = vsel %vm277, %v1060, %v1062
      %v1064 = vsel %vm311, %v1061, 0
      %v1066 = vsel %vm311, %v1063, 0
      %1068 = vmatprep.subr.mxu0 0.0
      %1069 = vmatpush1.msra.mxu0 %v255
      %1070 = vmatprep.subr.mxu0 0.0
      %1071 = vmatpush1.msra.mxu0 0.0
      %1072 = vmatprep.subr.mxu0 0.0
      %1073 = vmatpush1.msra.mxu0 0.0
      %1074 = vmatprep.subr.mxu0 0.0
      %1075 = vmatpush1.msra.mxu0 0.0
      %1076 = vmatprep.subr.mxu0 0.0
      %1077 = vmatpush1.msra.mxu0 0.0
      %1078 = vmatprep.subr.mxu0 0.0
      %1079 = vmatpush1.msra.mxu0 0.0
      %1080 = vmatprep.subr.mxu0 0.0
      %1081 = vmatpush1.msra.mxu0 0.0
      %1082 = vmatprep.subr.mxu0 0.0
      %1083 = vmatpush1.msra.mxu0 0.0
      %1084 = vmatprep.subr.mxu0 0.0
      %1085 = vmatpush1.msra.mxu0 0.0
      %1086 = vmatprep.subr.mxu0 0.0
      %1087 = vmatpush1.msra.mxu0 0.0
      %1088 = vmatprep.subr.mxu0 0.0
      %1089 = vmatpush1.msra.mxu0 0.0
      %1090 = vmatprep.subr.mxu0 0.0
      %1091 = vmatpush1.msra.mxu0 0.0
      %1092 = vmatprep.subr.mxu0 0.0
      %1093 = vmatpush1.msra.mxu0 0.0
      %1094 = vmatprep.subr.mxu0 0.0
      %1095 = vmatpush1.msra.mxu0 0.0
      %1096 = vmatprep.subr.mxu0 0.0
      %1097 = vmatpush1.msra.mxu0 0.0
      %1098 = vmatprep.subr.mxu0 0.0
      %1099 = vmatpush1.msra.mxu0 0.0
      %1100 = vmatprep.subr.mxu0 0.0
      %1101 = vmatpush1.msra.mxu0 0.0
      %1102 = vmatprep.subr.mxu0 0.0
      %1103 = vmatpush1.msra.mxu0 0.0
      %1104 = vmatprep.subr.mxu0 0.0
      %1105 = vmatpush1.msra.mxu0 0.0
      %1106 = vmatprep.subr.mxu0 0.0
      %1107 = vmatpush1.msra.mxu0 0.0
      %1108 = vmatprep.subr.mxu0 0.0
      %1109 = vmatpush1.msra.mxu0 0.0
      %1110 = vmatprep.subr.mxu0 0.0
      %1111 = vmatpush1.msra.mxu0 0.0
      %1112 = vmatprep.subr.mxu0 0.0
      %1113 = vmatpush1.msra.mxu0 0.0
      %1114 = vmatprep.subr.mxu0 0.0
      %1115 = vmatpush1.msra.mxu0 0.0
      %1116 = vmatprep.subr.mxu0 0.0
      %1117 = vmatpush1.msra.mxu0 0.0
      %1118 = vmatprep.subr.mxu0 0.0
      %1119 = vmatpush1.msra.mxu0 0.0
      %1120 = vmatprep.subr.mxu0 0.0
      %1121 = vmatpush1.msra.mxu0 0.0
      %1122 = vmatprep.subr.mxu0 0.0
      %1123 = vmatpush1.msra.mxu0 0.0
      %1124 = vmatprep.subr.mxu0 0.0
      %1125 = vmatpush1.msra.mxu0 0.0
      %1126 = vmatprep.subr.mxu0 0.0
      %1127 = vmatpush1.msra.mxu0 0.0
      %1128 = vmatprep.subr.mxu0 0.0
      %1129 = vmatpush1.msra.mxu0 0.0
      %1130 = vmatprep.subr.mxu0 0.0
      %1131 = vmatpush1.msra.mxu0 0.0
      %1132 = vmatprep.mubr.f32.mxu0 0.0
      %1133 = vmatmul.mubr.f32.gmra.mrb[0].mxu0 %v316
      %v1134 = vpop.f32.mrb[0].mxu0
      %v1135 = vadd.f32 0.0, %v1134
      %v1136 = vpop.f32.mrb[0].mxu0
      %1137 = vmatprep.mubr.f32.mxu0 0.0
      %1138 = vmatmul.mubr.f32.gmra.mrb[0].mxu0 %v318
      %v1139 = vpop.f32.mrb[0].mxu0
      %v1140 = vadd.f32 0.0, %v1139
      %v1141 = vpop.f32.mrb[0].mxu0
      %1142 = vmatprep.mubr.f32.mxu0 0.0
      %1143 = vmatmul.mubr.f32.gmra.mrb[0].mxu0 %v320
      %v1144 = vpop.f32.mrb[0].mxu0
      %v1145 = vadd.f32 0.0, %v1144
      %v1146 = vpop.f32.mrb[0].mxu0
      %1147 = vmatprep.mubr.f32.mxu0 0.0
      %1148 = vmatmul.mubr.f32.gmra.mrb[0].mxu0 %v322
      %v1149 = vpop.f32.mrb[0].mxu0
      %v1150 = vadd.f32 0.0, %v1149
      %v1151 = vpop.f32.mrb[0].mxu0
      %1152 = vmatprep.mubr.f32.mxu0 0.0
      %1153 = vmatmul.mubr.f32.gmra.mrb[0].mxu0 %v324
      %v1154 = vpop.f32.mrb[0].mxu0
      %v1155 = vadd.f32 0.0, %v1154
      %v1156 = vpop.f32.mrb[0].mxu0
      %1157 = vmatprep.mubr.f32.mxu0 0.0
      %1158 = vmatmul.mubr.f32.gmra.mrb[0].mxu0 %v326
      %v1159 = vpop.f32.mrb[0].mxu0
      %v1160 = vadd.f32 0.0, %v1159
      %v1161 = vpop.f32.mrb[0].mxu0
      %1162 = vmatprep.mubr.f32.mxu0 0.0
      %1163 = vmatmul.mubr.f32.gmra.mrb[0].mxu0 %v328
      %v1164 = vpop.f32.mrb[0].mxu0
      %v1165 = vadd.f32 0.0, %v1164
      %v1166 = vpop.f32.mrb[0].mxu0
      %1167 = vmatprep.mubr.f32.mxu0 0.0
      %1168 = vmatmul.mubr.f32.gmra.mrb[0].mxu0 %v330
      %v1169 = vpop.f32.mrb[0].mxu0
      %v1170 = vadd.f32 0.0, %v1169
      %v1171 = vpop.f32.mrb[0].mxu0
      %1172 = vmatprep.mubr.f32.mxu0 0.0
      %1173 = vmatmul.mubr.f32.gmra.mrb[0].mxu0 %v332
      %v1174 = vpop.f32.mrb[0].mxu0
      %v1175 = vadd.f32 0.0, %v1174
      %v1176 = vpop.f32.mrb[0].mxu0
      %1177 = vmatprep.mubr.f32.mxu0 0.0
      %1178 = vmatmul.mubr.f32.gmra.mrb[0].mxu0 %v334
      %v1179 = vpop.f32.mrb[0].mxu0
      %v1180 = vadd.f32 0.0, %v1179
      %v1181 = vpop.f32.mrb[0].mxu0
      %1182 = vmatprep.mubr.f32.mxu0 0.0
      %1183 = vmatmul.mubr.f32.gmra.mrb[0].mxu0 %v336
      %v1184 = vpop.f32.mrb[0].mxu0
      %v1185 = vadd.f32 0.0, %v1184
      %v1186 = vpop.f32.mrb[0].mxu0
      %1187 = vmatprep.mubr.f32.mxu0 0.0
      %1188 = vmatmul.mubr.f32.gmra.mrb[0].mxu0 %v338
      %v1189 = vpop.f32.mrb[0].mxu0
      %v1190 = vadd.f32 0.0, %v1189
      %v1191 = vpop.f32.mrb[0].mxu0
      %1192 = vmatprep.mubr.f32.mxu0 0.0
      %1193 = vmatmul.mubr.f32.gmra.mrb[0].mxu0 %v340
      %v1194 = vpop.f32.mrb[0].mxu0
      %v1195 = vadd.f32 0.0, %v1194
      %v1196 = vpop.f32.mrb[0].mxu0
      %1197 = vmatprep.mubr.f32.mxu0 0.0
      %1198 = vmatmul.mubr.f32.gmra.mrb[0].mxu0 %v342
      %v1199 = vpop.f32.mrb[0].mxu0
      %v1200 = vadd.f32 0.0, %v1199
      %v1201 = vpop.f32.mrb[0].mxu0
      %1202 = vmatprep.mubr.f32.mxu0 0.0
      %1203 = vmatmul.mubr.f32.gmra.mrb[0].mxu0 %v1064
      %v1204 = vpop.f32.mrb[0].mxu0
      %v1205 = vadd.f32 0.0, %v1204
      %v1206 = vpop.f32.mrb[0].mxu0
      %1207 = vmatprep.mubr.f32.mxu0 0.0
      %1208 = vmatmul.mubr.f32.gmra.mrb[0].mxu0 %v1066
      %v1209 = vpop.f32.mrb[0].mxu0
      %v1210 = vadd.f32 0.0, %v1209
      %v1211 = vpop.f32.mrb[0].mxu0
      %1212 = vdwg.mxu0
      %v1213 = vadd.f32 %v1043, %v1135
      %v1214 = vadd.f32 %v1044, %v1140
      %v1215 = vadd.f32 %v1045, %v1145
      %v1216 = vadd.f32 %v1046, %v1150
      %v1217 = vadd.f32 %v1047, %v1155
      %v1218 = vadd.f32 %v1048, %v1160
      %v1219 = vadd.f32 %v1049, %v1165
      %v1220 = vadd.f32 %v1050, %v1170
      %v1221 = vadd.f32 %v1051, %v1175
      %v1222 = vadd.f32 %v1052, %v1180
      %v1223 = vadd.f32 %v1053, %v1185
      %v1224 = vadd.f32 %v1054, %v1190
      %v1225 = vadd.f32 %v1055, %v1195
      %v1226 = vadd.f32 %v1056, %v1200
      %v1227 = vadd.f32 %v1057, %v1205
      %v1228 = vadd.f32 %v1058, %v1210
      %v1229 = vrot.slane %v247, 2
      %v1230 = vsel %vm666, %v698, %v1229
      %v1231 = vrot.slane %v248, 2
      %v1232 = vsel %vm666, %v1229, %v1231
      %v1233 = vsel %vm311, %v1230, 0
      %v1235 = vsel %vm311, %v1232, 0
      %1237 = vmatprep.subr.mxu0 0.0
      %1238 = vmatpush1.msra.mxu0 %v256
      %1239 = vmatprep.subr.mxu0 0.0
      %1240 = vmatpush1.msra.mxu0 0.0
      %1241 = vmatprep.subr.mxu0 0.0
      %1242 = vmatpush1.msra.mxu0 0.0
      %1243 = vmatprep.subr.mxu0 0.0
      %1244 = vmatpush1.msra.mxu0 0.0
      %1245 = vmatprep.subr.mxu0 0.0
      %1246 = vmatpush1.msra.mxu0 0.0
      %1247 = vmatprep.subr.mxu0 0.0
      %1248 = vmatpush1.msra.mxu0 0.0
      %1249 = vmatprep.subr.mxu0 0.0
      %1250 = vmatpush1.msra.mxu0 0.0
      %1251 = vmatprep.subr.mxu0 0.0
      %1252 = vmatpush1.msra.mxu0 0.0
      %1253 = vmatprep.subr.mxu0 0.0
      %1254 = vmatpush1.msra.mxu0 0.0
      %1255 = vmatprep.subr.mxu0 0.0
      %1256 = vmatpush1.msra.mxu0 0.0
      %1257 = vmatprep.subr.mxu0 0.0
      %1258 = vmatpush1.msra.mxu0 0.0
      %1259 = vmatprep.subr.mxu0 0.0
      %1260 = vmatpush1.msra.mxu0 0.0
      %1261 = vmatprep.subr.mxu0 0.0
      %1262 = vmatpush1.msra.mxu0 0.0
      %1263 = vmatprep.subr.mxu0 0.0
      %1264 = vmatpush1.msra.mxu0 0.0
      %1265 = vmatprep.subr.mxu0 0.0
      %1266 = vmatpush1.msra.mxu0 0.0
      %1267 = vmatprep.subr.mxu0 0.0
      %1268 = vmatpush1.msra.mxu0 0.0
      %1269 = vmatprep.subr.mxu0 0.0
      %1270 = vmatpush1.msra.mxu0 0.0
      %1271 = vmatprep.subr.mxu0 0.0
      %1272 = vmatpush1.msra.mxu0 0.0
      %1273 = vmatprep.subr.mxu0 0.0
      %1274 = vmatpush1.msra.mxu0 0.0
      %1275 = vmatprep.subr.mxu0 0.0
      %1276 = vmatpush1.msra.mxu0 0.0
      %1277 = vmatprep.subr.mxu0 0.0
      %1278 = vmatpush1.msra.mxu0 0.0
      %1279 = vmatprep.subr.mxu0 0.0
      %1280 = vmatpush1.msra.mxu0 0.0
      %1281 = vmatprep.subr.mxu0 0.0
      %1282 = vmatpush1.msra.mxu0 0.0
      %1283 = vmatprep.subr.mxu0 0.0
      %1284 = vmatpush1.msra.mxu0 0.0
      %1285 = vmatprep.subr.mxu0 0.0
      %1286 = vmatpush1.msra.mxu0 0.0
      %1287 = vmatprep.subr.mxu0 0.0
      %1288 = vmatpush1.msra.mxu0 0.0
      %1289 = vmatprep.subr.mxu0 0.0
      %1290 = vmatpush1.msra.mxu0 0.0
      %1291 = vmatprep.subr.mxu0 0.0
      %1292 = vmatpush1.msra.mxu0 0.0
      %1293 = vmatprep.subr.mxu0 0.0
      %1294 = vmatpush1.msra.mxu0 0.0
      %1295 = vmatprep.subr.mxu0 0.0
      %1296 = vmatpush1.msra.mxu0 0.0
      %1297 = vmatprep.subr.mxu0 0.0
      %1298 = vmatpush1.msra.mxu0 0.0
      %1299 = vmatprep.subr.mxu0 0.0
      %1300 = vmatpush1.msra.mxu0 0.0
      %1301 = vmatprep.mubr.f32.mxu0 0.0
      %1302 = vmatmul.mubr.f32.gmra.mrb[0].mxu0 %v704
      %v1303 = vpop.f32.mrb[0].mxu0
      %v1304 = vadd.f32 0.0, %v1303
      %v1305 = vpop.f32.mrb[0].mxu0
      %1306 = vmatprep.mubr.f32.mxu0 0.0
      %1307 = vmatmul.mubr.f32.gmra.mrb[0].mxu0 %v706
      %v1308 = vpop.f32.mrb[0].mxu0
      %v1309 = vadd.f32 0.0, %v1308
      %v1310 = vpop.f32.mrb[0].mxu0
      %1311 = vmatprep.mubr.f32.mxu0 0.0
      %1312 = vmatmul.mubr.f32.gmra.mrb[0].mxu0 %v708
      %v1313 = vpop.f32.mrb[0].mxu0
      %v1314 = vadd.f32 0.0, %v1313
      %v1315 = vpop.f32.mrb[0].mxu0
      %1316 = vmatprep.mubr.f32.mxu0 0.0
      %1317 = vmatmul.mubr.f32.gmra.mrb[0].mxu0 %v710
      %v1318 = vpop.f32.mrb[0].mxu0
      %v1319 = vadd.f32 0.0, %v1318
      %v1320 = vpop.f32.mrb[0].mxu0
      %1321 = vmatprep.mubr.f32.mxu0 0.0
      %1322 = vmatmul.mubr.f32.gmra.mrb[0].mxu0 %v712
      %v1323 = vpop.f32.mrb[0].mxu0
      %v1324 = vadd.f32 0.0, %v1323
      %v1325 = vpop.f32.mrb[0].mxu0
      %1326 = vmatprep.mubr.f32.mxu0 0.0
      %1327 = vmatmul.mubr.f32.gmra.mrb[0].mxu0 %v714
      %v1328 = vpop.f32.mrb[0].mxu0
      %v1329 = vadd.f32 0.0, %v1328
      %v1330 = vpop.f32.mrb[0].mxu0
      %1331 = vmatprep.mubr.f32.mxu0 0.0
      %1332 = vmatmul.mubr.f32.gmra.mrb[0].mxu0 %v716
      %v1333 = vpop.f32.mrb[0].mxu0
      %v1334 = vadd.f32 0.0, %v1333
      %v1335 = vpop.f32.mrb[0].mxu0
      %1336 = vmatprep.mubr.f32.mxu0 0.0
      %1337 = vmatmul.mubr.f32.gmra.mrb[0].mxu0 %v718
      %v1338 = vpop.f32.mrb[0].mxu0
      %v1339 = vadd.f32 0.0, %v1338
      %v1340 = vpop.f32.mrb[0].mxu0
      %1341 = vmatprep.mubr.f32.mxu0 0.0
      %1342 = vmatmul.mubr.f32.gmra.mrb[0].mxu0 %v720
      %v1343 = vpop.f32.mrb[0].mxu0
      %v1344 = vadd.f32 0.0, %v1343
      %v1345 = vpop.f32.mrb[0].mxu0
      %1346 = vmatprep.mubr.f32.mxu0 0.0
      %1347 = vmatmul.mubr.f32.gmra.mrb[0].mxu0 %v722
      %v1348 = vpop.f32.mrb[0].mxu0
      %v1349 = vadd.f32 0.0, %v1348
      %v1350 = vpop.f32.mrb[0].mxu0
      %1351 = vmatprep.mubr.f32.mxu0 0.0
      %1352 = vmatmul.mubr.f32.gmra.mrb[0].mxu0 %v724
      %v1353 = vpop.f32.mrb[0].mxu0
      %v1354 = vadd.f32 0.0, %v1353
      %v1355 = vpop.f32.mrb[0].mxu0
      %1356 = vmatprep.mubr.f32.mxu0 0.0
      %1357 = vmatmul.mubr.f32.gmra.mrb[0].mxu0 %v726
      %v1358 = vpop.f32.mrb[0].mxu0
      %v1359 = vadd.f32 0.0, %v1358
      %v1360 = vpop.f32.mrb[0].mxu0
      %1361 = vmatprep.mubr.f32.mxu0 0.0
      %1362 = vmatmul.mubr.f32.gmra.mrb[0].mxu0 %v728
      %v1363 = vpop.f32.mrb[0].mxu0
      %v1364 = vadd.f32 0.0, %v1363
      %v1365 = vpop.f32.mrb[0].mxu0
      %1366 = vmatprep.mubr.f32.mxu0 0.0
      %1367 = vmatmul.mubr.f32.gmra.mrb[0].mxu0 %v730
      %v1368 = vpop.f32.mrb[0].mxu0
      %v1369 = vadd.f32 0.0, %v1368
      %v1370 = vpop.f32.mrb[0].mxu0
      %1371 = vmatprep.mubr.f32.mxu0 0.0
      %1372 = vmatmul.mubr.f32.gmra.mrb[0].mxu0 %v1233
      %v1373 = vpop.f32.mrb[0].mxu0
      %v1374 = vadd.f32 0.0, %v1373
      %v1375 = vpop.f32.mrb[0].mxu0
      %1376 = vmatprep.mubr.f32.mxu0 0.0
      %1377 = vmatmul.mubr.f32.gmra.mrb[0].mxu0 %v1235
      %v1378 = vpop.f32.mrb[0].mxu0
      %v1379 = vadd.f32 0.0, %v1378
      %v1380 = vpop.f32.mrb[0].mxu0
      %1381 = vdwg.mxu0
      %v1382 = vadd.f32 %v1213, %v1304
      %v1383 = vadd.f32 %v1214, %v1309
      %v1384 = vadd.f32 %v1215, %v1314
      %v1385 = vadd.f32 %v1216, %v1319
      %v1386 = vadd.f32 %v1217, %v1324
      %v1387 = vadd.f32 %v1218, %v1329
      %v1388 = vadd.f32 %v1219, %v1334
      %v1389 = vadd.f32 %v1220, %v1339
      %v1390 = vadd.f32 %v1221, %v1344
      %v1391 = vadd.f32 %v1222, %v1349
      %v1392 = vadd.f32 %v1223, %v1354
      %v1393 = vadd.f32 %v1224, %v1359
      %v1394 = vadd.f32 %v1225, %v1364
      %v1395 = vadd.f32 %v1226, %v1369
      %v1396 = vadd.f32 %v1227, %v1374
      %v1397 = vadd.f32 %v1228, %v1379
      %v1398 = vsel %vm311, %v248, 0
      %v1401 = vsel %vm311, %v249, 0
      %1403 = vmatprep.subr.mxu0 0.0
      %1404 = vmatpush1.msra.mxu0 %v257
      %1405 = vmatprep.subr.mxu0 0.0
      %1406 = vmatpush1.msra.mxu0 0.0
      %1407 = vmatprep.subr.mxu0 0.0
      %1408 = vmatpush1.msra.mxu0 0.0
      %1409 = vmatprep.subr.mxu0 0.0
      %1410 = vmatpush1.msra.mxu0 0.0
      %1411 = vmatprep.subr.mxu0 0.0
      %1412 = vmatpush1.msra.mxu0 0.0
      %1413 = vmatprep.subr.mxu0 0.0
      %1414 = vmatpush1.msra.mxu0 0.0
      %1415 = vmatprep.subr.mxu0 0.0
      %1416 = vmatpush1.msra.mxu0 0.0
      %1417 = vmatprep.subr.mxu0 0.0
      %1418 = vmatpush1.msra.mxu0 0.0
      %1419 = vmatprep.subr.mxu0 0.0
      %1420 = vmatpush1.msra.mxu0 0.0
      %1421 = vmatprep.subr.mxu0 0.0
      %1422 = vmatpush1.msra.mxu0 0.0
      %1423 = vmatprep.subr.mxu0 0.0
      %1424 = vmatpush1.msra.mxu0 0.0
      %1425 = vmatprep.subr.mxu0 0.0
      %1426 = vmatpush1.msra.mxu0 0.0
      %1427 = vmatprep.subr.mxu0 0.0
      %1428 = vmatpush1.msra.mxu0 0.0
      %1429 = vmatprep.subr.mxu0 0.0
      %1430 = vmatpush1.msra.mxu0 0.0
      %1431 = vmatprep.subr.mxu0 0.0
      %1432 = vmatpush1.msra.mxu0 0.0
      %1433 = vmatprep.subr.mxu0 0.0
      %1434 = vmatpush1.msra.mxu0 0.0
      %1435 = vmatprep.subr.mxu0 0.0
      %1436 = vmatpush1.msra.mxu0 0.0
      %1437 = vmatprep.subr.mxu0 0.0
      %1438 = vmatpush1.msra.mxu0 0.0
      %1439 = vmatprep.subr.mxu0 0.0
      %1440 = vmatpush1.msra.mxu0 0.0
      %1441 = vmatprep.subr.mxu0 0.0
      %1442 = vmatpush1.msra.mxu0 0.0
      %1443 = vmatprep.subr.mxu0 0.0
      %1444 = vmatpush1.msra.mxu0 0.0
      %1445 = vmatprep.subr.mxu0 0.0
      %1446 = vmatpush1.msra.mxu0 0.0
      %1447 = vmatprep.subr.mxu0 0.0
      %1448 = vmatpush1.msra.mxu0 0.0
      %1449 = vmatprep.subr.mxu0 0.0
      %1450 = vmatpush1.msra.mxu0 0.0
      %1451 = vmatprep.subr.mxu0 0.0
      %1452 = vmatpush1.msra.mxu0 0.0
      %1453 = vmatprep.subr.mxu0 0.0
      %1454 = vmatpush1.msra.mxu0 0.0
      %1455 = vmatprep.subr.mxu0 0.0
      %1456 = vmatpush1.msra.mxu0 0.0
      %1457 = vmatprep.subr.mxu0 0.0
      %1458 = vmatpush1.msra.mxu0 0.0
      %1459 = vmatprep.subr.mxu0 0.0
      %1460 = vmatpush1.msra.mxu0 0.0
      %1461 = vmatprep.subr.mxu0 0.0
      %1462 = vmatpush1.msra.mxu0 0.0
      %1463 = vmatprep.subr.mxu0 0.0
      %1464 = vmatpush1.msra.mxu0 0.0
      %1465 = vmatprep.subr.mxu0 0.0
      %1466 = vmatpush1.msra.mxu0 0.0
      %1467 = vmatprep.mubr.f32.mxu0 0.0
      %1468 = vmatmul.mubr.f32.gmra.mrb[0].mxu0 %v497
      %v1469 = vpop.f32.mrb[0].mxu0
      %v1470 = vadd.f32 0.0, %v1469
      %v1471 = vpop.f32.mrb[0].mxu0
      %1472 = vmatprep.mubr.f32.mxu0 0.0
      %1473 = vmatmul.mubr.f32.gmra.mrb[0].mxu0 %v499
      %v1474 = vpop.f32.mrb[0].mxu0
      %v1475 = vadd.f32 0.0, %v1474
      %v1476 = vpop.f32.mrb[0].mxu0
      %1477 = vmatprep.mubr.f32.mxu0 0.0
      %1478 = vmatmul.mubr.f32.gmra.mrb[0].mxu0 %v501
      %v1479 = vpop.f32.mrb[0].mxu0
      %v1480 = vadd.f32 0.0, %v1479
      %v1481 = vpop.f32.mrb[0].mxu0
      %1482 = vmatprep.mubr.f32.mxu0 0.0
      %1483 = vmatmul.mubr.f32.gmra.mrb[0].mxu0 %v503
      %v1484 = vpop.f32.mrb[0].mxu0
      %v1485 = vadd.f32 0.0, %v1484
      %v1486 = vpop.f32.mrb[0].mxu0
      %1487 = vmatprep.mubr.f32.mxu0 0.0
      %1488 = vmatmul.mubr.f32.gmra.mrb[0].mxu0 %v505
      %v1489 = vpop.f32.mrb[0].mxu0
      %v1490 = vadd.f32 0.0, %v1489
      %v1491 = vpop.f32.mrb[0].mxu0
      %1492 = vmatprep.mubr.f32.mxu0 0.0
      %1493 = vmatmul.mubr.f32.gmra.mrb[0].mxu0 %v507
      %v1494 = vpop.f32.mrb[0].mxu0
      %v1495 = vadd.f32 0.0, %v1494
      %v1496 = vpop.f32.mrb[0].mxu0
      %1497 = vmatprep.mubr.f32.mxu0 0.0
      %1498 = vmatmul.mubr.f32.gmra.mrb[0].mxu0 %v509
      %v1499 = vpop.f32.mrb[0].mxu0
      %v1500 = vadd.f32 0.0, %v1499
      %v1501 = vpop.f32.mrb[0].mxu0
      %1502 = vmatprep.mubr.f32.mxu0 0.0
      %1503 = vmatmul.mubr.f32.gmra.mrb[0].mxu0 %v511
      %v1504 = vpop.f32.mrb[0].mxu0
      %v1505 = vadd.f32 0.0, %v1504
      %v1506 = vpop.f32.mrb[0].mxu0
      %1507 = vmatprep.mubr.f32.mxu0 0.0
      %1508 = vmatmul.mubr.f32.gmra.mrb[0].mxu0 %v513
      %v1509 = vpop.f32.mrb[0].mxu0
      %v1510 = vadd.f32 0.0, %v1509
      %v1511 = vpop.f32.mrb[0].mxu0
      %1512 = vmatprep.mubr.f32.mxu0 0.0
      %1513 = vmatmul.mubr.f32.gmra.mrb[0].mxu0 %v515
      %v1514 = vpop.f32.mrb[0].mxu0
      %v1515 = vadd.f32 0.0, %v1514
      %v1516 = vpop.f32.mrb[0].mxu0
      %1517 = vmatprep.mubr.f32.mxu0 0.0
      %1518 = vmatmul.mubr.f32.gmra.mrb[0].mxu0 %v517
      %v1519 = vpop.f32.mrb[0].mxu0
      %v1520 = vadd.f32 0.0, %v1519
      %v1521 = vpop.f32.mrb[0].mxu0
      %1522 = vmatprep.mubr.f32.mxu0 0.0
      %1523 = vmatmul.mubr.f32.gmra.mrb[0].mxu0 %v519
      %v1524 = vpop.f32.mrb[0].mxu0
      %v1525 = vadd.f32 0.0, %v1524
      %v1526 = vpop.f32.mrb[0].mxu0
      %1527 = vmatprep.mubr.f32.mxu0 0.0
      %1528 = vmatmul.mubr.f32.gmra.mrb[0].mxu0 %v893
      %v1529 = vpop.f32.mrb[0].mxu0
      %v1530 = vadd.f32 0.0, %v1529
      %v1531 = vpop.f32.mrb[0].mxu0
      %1532 = vmatprep.mubr.f32.mxu0 0.0
      %1533 = vmatmul.mubr.f32.gmra.mrb[0].mxu0 %v896
      %v1534 = vpop.f32.mrb[0].mxu0
      %v1535 = vadd.f32 0.0, %v1534
      %v1536 = vpop.f32.mrb[0].mxu0
      %1537 = vmatprep.mubr.f32.mxu0 0.0
      %1538 = vmatmul.mubr.f32.gmra.mrb[0].mxu0 %v1398
      %v1539 = vpop.f32.mrb[0].mxu0
      %v1540 = vadd.f32 0.0, %v1539
      %v1541 = vpop.f32.mrb[0].mxu0
      %1542 = vmatprep.mubr.f32.mxu0 0.0
      %1543 = vmatmul.mubr.f32.gmra.mrb[0].mxu0 %v1401
      %v1544 = vpop.f32.mrb[0].mxu0
      %v1545 = vadd.f32 0.0, %v1544
      %v1546 = vpop.f32.mrb[0].mxu0
      %1547 = vdwg.mxu0
      %v1548 = vadd.f32 %v1382, %v1470
      %v1549 = vadd.f32 %v1383, %v1475
      %v1550 = vadd.f32 %v1384, %v1480
      %v1551 = vadd.f32 %v1385, %v1485
      %v1552 = vadd.f32 %v1386, %v1490
      %v1553 = vadd.f32 %v1387, %v1495
      %v1554 = vadd.f32 %v1388, %v1500
      %v1555 = vadd.f32 %v1389, %v1505
      %v1556 = vadd.f32 %v1390, %v1510
      %v1557 = vadd.f32 %v1391, %v1515
      %v1558 = vadd.f32 %v1392, %v1520
      %v1559 = vadd.f32 %v1393, %v1525
      %v1560 = vadd.f32 %v1394, %v1530
      %v1561 = vadd.f32 %v1395, %v1535
      %v1562 = vadd.f32 %v1396, %v1540
      %v1563 = vadd.f32 %v1397, %v1545
      %v1565 = vrot.slane %v249, 1
      %v1566 = vsel %vm277, %v1062, %v1565
      %v1567 = vrot.slane %v250, 1
      %v1568 = vsel %vm277, %v1565, %v1567
      %v1569 = vsel %vm311, %v1566, 0
      %v1571 = vsel %vm311, %v1568, 0
      %1573 = vmatprep.subr.mxu0 0.0
      %1574 = vmatpush1.msra.mxu0 %v258
      %1575 = vmatprep.subr.mxu0 0.0
      %1576 = vmatpush1.msra.mxu0 0.0
      %1577 = vmatprep.subr.mxu0 0.0
      %1578 = vmatpush1.msra.mxu0 0.0
      %1579 = vmatprep.subr.mxu0 0.0
      %1580 = vmatpush1.msra.mxu0 0.0
      %1581 = vmatprep.subr.mxu0 0.0
      %1582 = vmatpush1.msra.mxu0 0.0
      %1583 = vmatprep.subr.mxu0 0.0
      %1584 = vmatpush1.msra.mxu0 0.0
      %1585 = vmatprep.subr.mxu0 0.0
      %1586 = vmatpush1.msra.mxu0 0.0
      %1587 = vmatprep.subr.mxu0 0.0
      %1588 = vmatpush1.msra.mxu0 0.0
      %1589 = vmatprep.subr.mxu0 0.0
      %1590 = vmatpush1.msra.mxu0 0.0
      %1591 = vmatprep.subr.mxu0 0.0
      %1592 = vmatpush1.msra.mxu0 0.0
      %1593 = vmatprep.subr.mxu0 0.0
      %1594 = vmatpush1.msra.mxu0 0.0
      %1595 = vmatprep.subr.mxu0 0.0
      %1596 = vmatpush1.msra.mxu0 0.0
      %1597 = vmatprep.subr.mxu0 0.0
      %1598 = vmatpush1.msra.mxu0 0.0
      %1599 = vmatprep.subr.mxu0 0.0
      %1600 = vmatpush1.msra.mxu0 0.0
      %1601 = vmatprep.subr.mxu0 0.0
      %1602 = vmatpush1.msra.mxu0 0.0
      %1603 = vmatprep.subr.mxu0 0.0
      %1604 = vmatpush1.msra.mxu0 0.0
      %1605 = vmatprep.subr.mxu0 0.0
      %1606 = vmatpush1.msra.mxu0 0.0
      %1607 = vmatprep.subr.mxu0 0.0
      %1608 = vmatpush1.msra.mxu0 0.0
      %1609 = vmatprep.subr.mxu0 0.0
      %1610 = vmatpush1.msra.mxu0 0.0
      %1611 = vmatprep.subr.mxu0 0.0
      %1612 = vmatpush1.msra.mxu0 0.0
      %1613 = vmatprep.subr.mxu0 0.0
      %1614 = vmatpush1.msra.mxu0 0.0
      %1615 = vmatprep.subr.mxu0 0.0
      %1616 = vmatpush1.msra.mxu0 0.0
      %1617 = vmatprep.subr.mxu0 0.0
      %1618 = vmatpush1.msra.mxu0 0.0
      %1619 = vmatprep.subr.mxu0 0.0
      %1620 = vmatpush1.msra.mxu0 0.0
      %1621 = vmatprep.subr.mxu0 0.0
      %1622 = vmatpush1.msra.mxu0 0.0
      %1623 = vmatprep.subr.mxu0 0.0
      %1624 = vmatpush1.msra.mxu0 0.0
      %1625 = vmatprep.subr.mxu0 0.0
      %1626 = vmatpush1.msra.mxu0 0.0
      %1627 = vmatprep.subr.mxu0 0.0
      %1628 = vmatpush1.msra.mxu0 0.0
      %1629 = vmatprep.subr.mxu0 0.0
      %1630 = vmatpush1.msra.mxu0 0.0
      %1631 = vmatprep.subr.mxu0 0.0
      %1632 = vmatpush1.msra.mxu0 0.0
      %1633 = vmatprep.subr.mxu0 0.0
      %1634 = vmatpush1.msra.mxu0 0.0
      %1635 = vmatprep.subr.mxu0 0.0
      %1636 = vmatpush1.msra.mxu0 0.0
      %1637 = vmatprep.mubr.f32.mxu0 0.0
      %1638 = vmatmul.mubr.f32.gmra.mrb[0].mxu0 %v320
      %v1639 = vpop.f32.mrb[0].mxu0
      %v1640 = vadd.f32 0.0, %v1639
      %v1641 = vpop.f32.mrb[0].mxu0
      %1642 = vmatprep.mubr.f32.mxu0 0.0
      %1643 = vmatmul.mubr.f32.gmra.mrb[0].mxu0 %v322
      %v1644 = vpop.f32.mrb[0].mxu0
      %v1645 = vadd.f32 0.0, %v1644
      %v1646 = vpop.f32.mrb[0].mxu0
      %1647 = vmatprep.mubr.f32.mxu0 0.0
      %1648 = vmatmul.mubr.f32.gmra.mrb[0].mxu0 %v324
      %v1649 = vpop.f32.mrb[0].mxu0
      %v1650 = vadd.f32 0.0, %v1649
      %v1651 = vpop.f32.mrb[0].mxu0
      %1652 = vmatprep.mubr.f32.mxu0 0.0
      %1653 = vmatmul.mubr.f32.gmra.mrb[0].mxu0 %v326
      %v1654 = vpop.f32.mrb[0].mxu0
      %v1655 = vadd.f32 0.0, %v1654
      %v1656 = vpop.f32.mrb[0].mxu0
      %1657 = vmatprep.mubr.f32.mxu0 0.0
      %1658 = vmatmul.mubr.f32.gmra.mrb[0].mxu0 %v328
      %v1659 = vpop.f32.mrb[0].mxu0
      %v1660 = vadd.f32 0.0, %v1659
      %v1661 = vpop.f32.mrb[0].mxu0
      %1662 = vmatprep.mubr.f32.mxu0 0.0
      %1663 = vmatmul.mubr.f32.gmra.mrb[0].mxu0 %v330
      %v1664 = vpop.f32.mrb[0].mxu0
      %v1665 = vadd.f32 0.0, %v1664
      %v1666 = vpop.f32.mrb[0].mxu0
      %1667 = vmatprep.mubr.f32.mxu0 0.0
      %1668 = vmatmul.mubr.f32.gmra.mrb[0].mxu0 %v332
      %v1669 = vpop.f32.mrb[0].mxu0
      %v1670 = vadd.f32 0.0, %v1669
      %v1671 = vpop.f32.mrb[0].mxu0
      %1672 = vmatprep.mubr.f32.mxu0 0.0
      %1673 = vmatmul.mubr.f32.gmra.mrb[0].mxu0 %v334
      %v1674 = vpop.f32.mrb[0].mxu0
      %v1675 = vadd.f32 0.0, %v1674
      %v1676 = vpop.f32.mrb[0].mxu0
      %1677 = vmatprep.mubr.f32.mxu0 0.0
      %1678 = vmatmul.mubr.f32.gmra.mrb[0].mxu0 %v336
      %v1679 = vpop.f32.mrb[0].mxu0
      %v1680 = vadd.f32 0.0, %v1679
      %v1681 = vpop.f32.mrb[0].mxu0
      %1682 = vmatprep.mubr.f32.mxu0 0.0
      %1683 = vmatmul.mubr.f32.gmra.mrb[0].mxu0 %v338
      %v1684 = vpop.f32.mrb[0].mxu0
      %v1685 = vadd.f32 0.0, %v1684
      %v1686 = vpop.f32.mrb[0].mxu0
      %1687 = vmatprep.mubr.f32.mxu0 0.0
      %1688 = vmatmul.mubr.f32.gmra.mrb[0].mxu0 %v340
      %v1689 = vpop.f32.mrb[0].mxu0
      %v1690 = vadd.f32 0.0, %v1689
      %v1691 = vpop.f32.mrb[0].mxu0
      %1692 = vmatprep.mubr.f32.mxu0 0.0
      %1693 = vmatmul.mubr.f32.gmra.mrb[0].mxu0 %v342
      %v1694 = vpop.f32.mrb[0].mxu0
      %v1695 = vadd.f32 0.0, %v1694
      %v1696 = vpop.f32.mrb[0].mxu0
      %1697 = vmatprep.mubr.f32.mxu0 0.0
      %1698 = vmatmul.mubr.f32.gmra.mrb[0].mxu0 %v1064
      %v1699 = vpop.f32.mrb[0].mxu0
      %v1700 = vadd.f32 0.0, %v1699
      %v1701 = vpop.f32.mrb[0].mxu0
      %1702 = vmatprep.mubr.f32.mxu0 0.0
      %1703 = vmatmul.mubr.f32.gmra.mrb[0].mxu0 %v1066
      %v1704 = vpop.f32.mrb[0].mxu0
      %v1705 = vadd.f32 0.0, %v1704
      %v1706 = vpop.f32.mrb[0].mxu0
      %1707 = vmatprep.mubr.f32.mxu0 0.0
      %1708 = vmatmul.mubr.f32.gmra.mrb[0].mxu0 %v1569
      %v1709 = vpop.f32.mrb[0].mxu0
      %v1710 = vadd.f32 0.0, %v1709
      %v1711 = vpop.f32.mrb[0].mxu0
      %1712 = vmatprep.mubr.f32.mxu0 0.0
      %1713 = vmatmul.mubr.f32.gmra.mrb[0].mxu0 %v1571
      %v1714 = vpop.f32.mrb[0].mxu0
      %v1715 = vadd.f32 0.0, %v1714
      %v1716 = vpop.f32.mrb[0].mxu0
      %1717 = vdwg.mxu0
      %v1718 = vadd.f32 %v1548, %v1640
      %v1719 = vadd.f32 %v1549, %v1645
      %v1720 = vadd.f32 %v1550, %v1650
      %v1721 = vadd.f32 %v1551, %v1655
      %v1722 = vadd.f32 %v1552, %v1660
      %v1723 = vadd.f32 %v1553, %v1665
      %v1724 = vadd.f32 %v1554, %v1670
      %v1725 = vadd.f32 %v1555, %v1675
      %v1726 = vadd.f32 %v1556, %v1680
      %v1727 = vadd.f32 %v1557, %v1685
      %v1728 = vadd.f32 %v1558, %v1690
      %v1729 = vadd.f32 %v1559, %v1695
      %v1730 = vadd.f32 %v1560, %v1700
      %v1731 = vadd.f32 %v1561, %v1705
      %v1732 = vadd.f32 %v1562, %v1710
      %v1733 = vadd.f32 %v1563, %v1715
      %v1734 = vrot.slane %v249, 2
      %v1735 = vsel %vm666, %v1231, %v1734
      %v1736 = vrot.slane %v250, 2
      %v1737 = vsel %vm666, %v1734, %v1736
      %v1738 = vsel %vm311, %v1735, 0
      %v1740 = vsel %vm311, %v1737, 0
      %1742 = vmatprep.subr.mxu0 0.0
      %1743 = vmatpush1.msra.mxu0 %v259
      %1744 = vmatprep.subr.mxu0 0.0
      %1745 = vmatpush1.msra.mxu0 0.0
      %1746 = vmatprep.subr.mxu0 0.0
      %1747 = vmatpush1.msra.mxu0 0.0
      %1748 = vmatprep.subr.mxu0 0.0
      %1749 = vmatpush1.msra.mxu0 0.0
      %1750 = vmatprep.subr.mxu0 0.0
      %1751 = vmatpush1.msra.mxu0 0.0
      %1752 = vmatprep.subr.mxu0 0.0
      %1753 = vmatpush1.msra.mxu0 0.0
      %1754 = vmatprep.subr.mxu0 0.0
      %1755 = vmatpush1.msra.mxu0 0.0
      %1756 = vmatprep.subr.mxu0 0.0
      %1757 = vmatpush1.msra.mxu0 0.0
      %1758 = vmatprep.subr.mxu0 0.0
      %1759 = vmatpush1.msra.mxu0 0.0
      %1760 = vmatprep.subr.mxu0 0.0
      %1761 = vmatpush1.msra.mxu0 0.0
      %1762 = vmatprep.subr.mxu0 0.0
      %1763 = vmatpush1.msra.mxu0 0.0
      %1764 = vmatprep.subr.mxu0 0.0
      %1765 = vmatpush1.msra.mxu0 0.0
      %1766 = vmatprep.subr.mxu0 0.0
      %1767 = vmatpush1.msra.mxu0 0.0
      %1768 = vmatprep.subr.mxu0 0.0
      %1769 = vmatpush1.msra.mxu0 0.0
      %1770 = vmatprep.subr.mxu0 0.0
      %1771 = vmatpush1.msra.mxu0 0.0
      %1772 = vmatprep.subr.mxu0 0.0
      %1773 = vmatpush1.msra.mxu0 0.0
      %1774 = vmatprep.subr.mxu0 0.0
      %1775 = vmatpush1.msra.mxu0 0.0
      %1776 = vmatprep.subr.mxu0 0.0
      %1777 = vmatpush1.msra.mxu0 0.0
      %1778 = vmatprep.subr.mxu0 0.0
      %1779 = vmatpush1.msra.mxu0 0.0
      %1780 = vmatprep.subr.mxu0 0.0
      %1781 = vmatpush1.msra.mxu0 0.0
      %1782 = vmatprep.subr.mxu0 0.0
      %1783 = vmatpush1.msra.mxu0 0.0
      %1784 = vmatprep.subr.mxu0 0.0
      %1785 = vmatpush1.msra.mxu0 0.0
      %1786 = vmatprep.subr.mxu0 0.0
      %1787 = vmatpush1.msra.mxu0 0.0
      %1788 = vmatprep.subr.mxu0 0.0
      %1789 = vmatpush1.msra.mxu0 0.0
      %1790 = vmatprep.subr.mxu0 0.0
      %1791 = vmatpush1.msra.mxu0 0.0
      %1792 = vmatprep.subr.mxu0 0.0
      %1793 = vmatpush1.msra.mxu0 0.0
      %1794 = vmatprep.subr.mxu0 0.0
      %1795 = vmatpush1.msra.mxu0 0.0
      %1796 = vmatprep.subr.mxu0 0.0
      %1797 = vmatpush1.msra.mxu0 0.0
      %1798 = vmatprep.subr.mxu0 0.0
      %1799 = vmatpush1.msra.mxu0 0.0
      %1800 = vmatprep.subr.mxu0 0.0
      %1801 = vmatpush1.msra.mxu0 0.0
      %1802 = vmatprep.subr.mxu0 0.0
      %1803 = vmatpush1.msra.mxu0 0.0
      %1804 = vmatprep.subr.mxu0 0.0
      %1805 = vmatpush1.msra.mxu0 0.0
      %1806 = vmatprep.mubr.f32.mxu0 0.0
      %1807 = vmatmul.mubr.f32.gmra.mrb[0].mxu0 %v708
      %v1808 = vpop.f32.mrb[0].mxu0
      %v1809 = vadd.f32 0.0, %v1808
      %v1810 = vpop.f32.mrb[0].mxu0
      %1811 = vmatprep.mubr.f32.mxu0 0.0
      %1812 = vmatmul.mubr.f32.gmra.mrb[0].mxu0 %v710
      %v1813 = vpop.f32.mrb[0].mxu0
      %v1814 = vadd.f32 0.0, %v1813
      %v1815 = vpop.f32.mrb[0].mxu0
      %1816 = vmatprep.mubr.f32.mxu0 0.0
      %1817 = vmatmul.mubr.f32.gmra.mrb[0].mxu0 %v712
      %v1818 = vpop.f32.mrb[0].mxu0
      %v1819 = vadd.f32 0.0, %v1818
      %v1820 = vpop.f32.mrb[0].mxu0
      %1821 = vmatprep.mubr.f32.mxu0 0.0
      %1822 = vmatmul.mubr.f32.gmra.mrb[0].mxu0 %v714
      %v1823 = vpop.f32.mrb[0].mxu0
      %v1824 = vadd.f32 0.0, %v1823
      %v1825 = vpop.f32.mrb[0].mxu0
      %1826 = vmatprep.mubr.f32.mxu0 0.0
      %1827 = vmatmul.mubr.f32.gmra.mrb[0].mxu0 %v716
      %v1828 = vpop.f32.mrb[0].mxu0
      %v1829 = vadd.f32 0.0, %v1828
      %v1830 = vpop.f32.mrb[0].mxu0
      %1831 = vmatprep.mubr.f32.mxu0 0.0
      %1832 = vmatmul.mubr.f32.gmra.mrb[0].mxu0 %v718
      %v1833 = vpop.f32.mrb[0].mxu0
      %v1834 = vadd.f32 0.0, %v1833
      %v1835 = vpop.f32.mrb[0].mxu0
      %1836 = vmatprep.mubr.f32.mxu0 0.0
      %1837 = vmatmul.mubr.f32.gmra.mrb[0].mxu0 %v720
      %v1838 = vpop.f32.mrb[0].mxu0
      %v1839 = vadd.f32 0.0, %v1838
      %v1840 = vpop.f32.mrb[0].mxu0
      %1841 = vmatprep.mubr.f32.mxu0 0.0
      %1842 = vmatmul.mubr.f32.gmra.mrb[0].mxu0 %v722
      %v1843 = vpop.f32.mrb[0].mxu0
      %v1844 = vadd.f32 0.0, %v1843
      %v1845 = vpop.f32.mrb[0].mxu0
      %1846 = vmatprep.mubr.f32.mxu0 0.0
      %1847 = vmatmul.mubr.f32.gmra.mrb[0].mxu0 %v724
      %v1848 = vpop.f32.mrb[0].mxu0
      %v1849 = vadd.f32 0.0, %v1848
      %v1850 = vpop.f32.mrb[0].mxu0
      %1851 = vmatprep.mubr.f32.mxu0 0.0
      %1852 = vmatmul.mubr.f32.gmra.mrb[0].mxu0 %v726
      %v1853 = vpop.f32.mrb[0].mxu0
      %v1854 = vadd.f32 0.0, %v1853
      %v1855 = vpop.f32.mrb[0].mxu0
      %1856 = vmatprep.mubr.f32.mxu0 0.0
      %1857 = vmatmul.mubr.f32.gmra.mrb[0].mxu0 %v728
      %v1858 = vpop.f32.mrb[0].mxu0
      %v1859 = vadd.f32 0.0, %v1858
      %v1860 = vpop.f32.mrb[0].mxu0
      %1861 = vmatprep.mubr.f32.mxu0 0.0
      %1862 = vmatmul.mubr.f32.gmra.mrb[0].mxu0 %v730
      %v1863 = vpop.f32.mrb[0].mxu0
      %v1864 = vadd.f32 0.0, %v1863
      %v1865 = vpop.f32.mrb[0].mxu0
      %1866 = vmatprep.mubr.f32.mxu0 0.0
      %1867 = vmatmul.mubr.f32.gmra.mrb[0].mxu0 %v1233
      %v1868 = vpop.f32.mrb[0].mxu0
      %v1869 = vadd.f32 0.0, %v1868
      %v1870 = vpop.f32.mrb[0].mxu0
      %1871 = vmatprep.mubr.f32.mxu0 0.0
      %1872 = vmatmul.mubr.f32.gmra.mrb[0].mxu0 %v1235
      %v1873 = vpop.f32.mrb[0].mxu0
      %v1874 = vadd.f32 0.0, %v1873
      %v1875 = vpop.f32.mrb[0].mxu0
      %1876 = vmatprep.mubr.f32.mxu0 0.0
      %1877 = vmatmul.mubr.f32.gmra.mrb[0].mxu0 %v1738
      %v1878 = vpop.f32.mrb[0].mxu0
      %v1879 = vadd.f32 0.0, %v1878
      %v1880 = vpop.f32.mrb[0].mxu0
      %1881 = vmatprep.mubr.f32.mxu0 0.0
      %1882 = vmatmul.mubr.f32.gmra.mrb[0].mxu0 %v1740
      %v1883 = vpop.f32.mrb[0].mxu0
      %v1884 = vadd.f32 0.0, %v1883
      %v1885 = vpop.f32.mrb[0].mxu0
      %1886 = vdwg.mxu0
      %v1887 = vadd.f32 %v1718, %v1809
      %v1888 = vadd.f32 %v1719, %v1814
      %v1889 = vadd.f32 %v1720, %v1819
      %v1890 = vadd.f32 %v1721, %v1824
      %v1891 = vadd.f32 %v1722, %v1829
      %v1892 = vadd.f32 %v1723, %v1834
      %v1893 = vadd.f32 %v1724, %v1839
      %v1894 = vadd.f32 %v1725, %v1844
      %v1895 = vadd.f32 %v1726, %v1849
      %v1896 = vadd.f32 %v1727, %v1854
      %v1897 = vadd.f32 %v1728, %v1859
      %v1898 = vadd.f32 %v1729, %v1864
      %v1899 = vadd.f32 %v1730, %v1869
      %v1900 = vadd.f32 %v1731, %v1874
      %v1901 = vadd.f32 %v1732, %v1879
      %v1902 = vadd.f32 %v1733, %v1884
      %v1903 = vld [vmem:[%s3] sm:$0x1]
      %v1905 = vlaneseq
      %v1906 = vshrl.u32 %v1905, 7
      %v1907 = vsub.s32 0, %v1906
      %v1908 = vrot.slane %v1903, %v1907
      %v1910 = vadd.f32 %v1887, %v1908
      %v1911 = vadd.f32 %v1888, %v1908
      %v1912 = vadd.f32 %v1889, %v1908
      %v1913 = vadd.f32 %v1890, %v1908
      %v1914 = vadd.f32 %v1891, %v1908
      %v1915 = vadd.f32 %v1892, %v1908
      %v1916 = vadd.f32 %v1893, %v1908
      %v1917 = vadd.f32 %v1894, %v1908
      %v1918 = vadd.f32 %v1895, %v1908
      %v1919 = vadd.f32 %v1896, %v1908
      %v1920 = vadd.f32 %v1897, %v1908
      %v1921 = vadd.f32 %v1898, %v1908
      %v1922 = vadd.f32 %v1899, %v1908
      %v1923 = vadd.f32 %v1900, %v1908
      %v1924 = vadd.f32 %v1901, %v1908
      %v1925 = vadd.f32 %v1902, %v1908
      %1926 = vst.msk [vmem:[%s228] sm:$0xff] %vm311, %v1910
      %1927 = vst.msk [vmem:[%s228 + $0x8] sm:$0xff] %vm311, %v1911
      %1928 = vst.msk [vmem:[%s228 + $0x10] sm:$0xff] %vm311, %v1912
      %1929 = vst.msk [vmem:[%s228 + $0x18] sm:$0xff] %vm311, %v1913
      %1930 = vst.msk [vmem:[%s228 + $0x20] sm:$0xff] %vm311, %v1914
      %1931 = vst.msk [vmem:[%s228 + $0x28] sm:$0xff] %vm311, %v1915
      %1932 = vst.msk [vmem:[%s228 + $0x30] sm:$0xff] %vm311, %v1916
      %1933 = vst.msk [vmem:[%s228 + $0x38] sm:$0xff] %vm311, %v1917
      %1934 = vst.msk [vmem:[%s228 + $0x40] sm:$0xff] %vm311, %v1918
      %1935 = vst.msk [vmem:[%s228 + $0x48] sm:$0xff] %vm311, %v1919
      %1936 = vst.msk [vmem:[%s228 + $0x50] sm:$0xff] %vm311, %v1920
      %1937 = vst.msk [vmem:[%s228 + $0x58] sm:$0xff] %vm311, %v1921
      %1938 = vst.msk [vmem:[%s228 + $0x60] sm:$0xff] %vm311, %v1922
      %1939 = vst.msk [vmem:[%s228 + $0x68] sm:$0xff] %vm311, %v1923
      %1940 = vst.msk [vmem:[%s228 + $0x70] sm:$0xff] %vm311, %v1924
      %1941 = vst.msk [vmem:[%s228 + $0x78] sm:$0xff] %vm311, %v1925
      %s1942 = smul.u32 16, %s15
      %p1943 = scmp.lt.s32.totalorder %s1942, 47
      %s1944 = scalar_select %p1943, %s1942, 47
      %s1945 = smul.addr %s1944, 8
      %s1946 = scalar_lea.vmem %s4, %s1945
      // Predicated region
      $region37: #{tpu_custom_call.1} parent=35 // pred_check
        %p1947 = pneg %p129
      $region38: #{tpu_custom_call.1} parent=35 // pred_check_branch
        %1949 = sbr.rel (%p1947) target = $region40
      $region39: #{tpu_custom_call.1} parent=35 // pred_region
        %s1950 = smul.u32 16, %s15
      $region40: #{tpu_custom_call.1} parent=35 // pred_fallthru
        _
    $region36: #{tpu_custom_call.1} parent=5 // pred_fallthru
      _
    %p1951 = scmp.le.s32.totalorder 2, %s10
    // Predicated region
    $region41: #{tpu_custom_call.1} parent=5 // pred_check
      %p1952 = pneg %p1951
    $region42: #{tpu_custom_call.1} parent=5 // pred_check_branch
      %1954 = sbr.rel (%p1952) target = $region44
    $region43: #{tpu_custom_call.1} parent=5 // pred_region
      %s1955 = ssub.s32 %s10, 2
      // Predicated region
      $region45: #{tpu_custom_call.1} parent=43 // pred_check
        %p1956 = pneg %p135
      $region46: #{tpu_custom_call.1} parent=43 // pred_check_branch
        %1958 = sbr.rel (%p1956) target = $region48
      $region47: #{tpu_custom_call.1} parent=43 // pred_region
        %s1959 = smul.u32 16, %s16
        %p1960 = scmp.lt.s32.totalorder %s1959, 47
        %s1961 = scalar_select %p1960, %s1959, 47
        %s1962 = smul.addr %s1961, 8
        %s1963 = scalar_lea.vmem %s4, %s1962
      $region48: #{tpu_custom_call.1} parent=43 // pred_fallthru
        _
    $region44: #{tpu_custom_call.1} parent=5 // pred_fallthru
      _
  $region6: #{tpu_custom_call.1} parent=0 // loop_footer
    %s14 = sadd.s32 1, %s10
  $region7: #{tpu_custom_call.1} parent=0 // loop_footer_branch
    %9 = sbr.rel target = $region3
  $region8: #{tpu_custom_call.1} parent=0 // loop_exit
    _

</llo_original>
